<compile_context>
chip_gen: v5e
topology: v5e:2x2
jax: 0.10.0
libtpu: 0.0.40
codegen_flags: <defaults>
</compile_context>

<pallas_src>
import jax
import jax.numpy as jnp
from jax import lax
from jax.experimental import pallas as pl
from jax.experimental.pallas import tpu as pltpu


def lstm_model_kernel(x_ref, w_in_ref, b_in_ref,
                      w_ih_ref, w_hh_ref, b_lstm_ref,
                      w_dec_ref, b_dec_ref,
                      h0_ref, c0_ref,
                      out_ref, hn_ref, cn_ref):
    n_layers, B, H = h0_ref.shape
    SB = x_ref.shape[0]                   # S * B
    S = SB // B

    # ---- input linear + layer-0 input-to-hidden projection, hoisted over the ----
    # ---- whole sequence (depends only on x -> off the recurrence chain)      ----
    emb = (jnp.dot(x_ref[...], w_in_ref[...], preferred_element_type=jnp.float32)
           + b_in_ref[...])                                            # (S*B, H)
    gx0 = (jnp.dot(emb, w_ih_ref[0], preferred_element_type=jnp.float32)
           + b_lstm_ref[0])                                            # (S*B, 4H)

    # Decoder weights: load once, reuse inside the last layer's time loop.
    w_dec = w_dec_ref[...]                                             # (H, O_pad)
    b_dec = b_dec_ref[...]                                             # (1, O_pad)

    # ---- stacked LSTM layers (PyTorch gate order: i, f, g, o) -------------------
    xs = None                              # layer-below per-step outputs (vregs)
    for layer in range(n_layers):
        w_hh = w_hh_ref[layer]                                         # (H, 4H)
        if layer > 0:
            w_ih = w_ih_ref[layer]                                     # (H, 4H)
            b_l = b_lstm_ref[layer]                                    # (1, 4H)
        h = h0_ref[layer]                                              # (B, H)
        c = c0_ref[layer]                                              # (B, H)
        is_last = layer == n_layers - 1
        hs = []

        # Fully unrolled time recurrence (S small & static).  Dependency structure
        # is a wavefront: step (layer, t) needs only (layer-1, t) and (layer, t-1).
        for t in range(S):
            if layer == 0:
                gx_t = gx0[t * B:(t + 1) * B, :]                       # static slice
            else:
                # Off the recurrence chain: depends only on the layer below's step t.
                gx_t = (jnp.dot(xs[t], w_ih, preferred_element_type=jnp.float32)
                        + b_l)                                         # (B, 4H)
            gates = gx_t + jnp.dot(h, w_hh, preferred_element_type=jnp.float32)
            sig = jax.nn.sigmoid(gates)                                # full-vreg EUP
            i_g = sig[:, 0 * H:1 * H]
            f_g = sig[:, 1 * H:2 * H]
            o_g = sig[:, 3 * H:4 * H]
            g_g = jnp.tanh(gates[:, 2 * H:3 * H])
            c = f_g * c + i_g * g_g
            h = o_g * jnp.tanh(c)
            if is_last:
                # Fused decoder: lane-dense (B, O_pad) row store, off the chain.
                out_ref[t * B:(t + 1) * B, :] = (
                    jnp.dot(h, w_dec, preferred_element_type=jnp.float32) + b_dec)
            else:
                hs.append(h)                                           # stays in vregs

        xs = hs
        hn_ref[layer] = h
        cn_ref[layer] = c


@jax.jit
def lstm_model_forward(inp, h0, c0,
                       w_in, b_in, w_ih, w_hh, b_lstm, w_dec, b_dec):
    S, B, I = inp.shape
    n_layers, _, H = h0.shape
    O = w_dec.shape[1]
    O_pad = ((O + 127) // 128) * 128       # lane-dense decoder output

    x2d = inp.reshape(S * B, I)            # sublane-dense 2-D slab
    w_dec_p = jnp.pad(w_dec, ((0, 0), (0, O_pad - O)))
    b_dec_p = jnp.pad(b_dec, ((0, 0), (0, O_pad - O)))

    vmem = pl.BlockSpec(memory_space=pltpu.MemorySpace.VMEM)
    n_in = 10
    out2d, hn, cn = pl.pallas_call(
        lstm_model_kernel,
        out_shape=(jax.ShapeDtypeStruct((S * B, O_pad), jnp.float32),
                   jax.ShapeDtypeStruct((n_layers, B, H), jnp.float32),
                   jax.ShapeDtypeStruct((n_layers, B, H), jnp.float32)),
        in_specs=[vmem] * n_in,
        out_specs=(vmem, vmem, vmem),
    )(x2d, w_in, b_in, w_ih, w_hh, b_lstm, w_dec_p, b_dec_p, h0, c0)
    return out2d[:, :O].reshape(S, B, O), (hn, cn)


def reference_forward(inp, h0, c0, w_in, b_in, w_ih, w_hh, b_lstm, w_dec, b_dec):
    """Pure-JAX reference with identical math (for correctness check)."""
    S, B, _ = inp.shape
    n_layers, _, H = h0.shape
    seq = jnp.einsum('sbi,ih->sbh', inp, w_in) + b_in
    hs, cs = [], []
    for layer in range(n_layers):
        def step(carry, x_t):
            h, c = carry
            gates = x_t @ w_ih[layer] + h @ w_hh[layer] + b_lstm[layer]
            i_g = jax.nn.sigmoid(gates[:, 0 * H:1 * H])
            f_g = jax.nn.sigmoid(gates[:, 1 * H:2 * H])
            g_g = jnp.tanh(gates[:, 2 * H:3 * H])
            o_g = jax.nn.sigmoid(gates[:, 3 * H:4 * H])
            c_new = f_g * c + i_g * g_g
            h_new = o_g * jnp.tanh(c_new)
            return (h_new, c_new), h_new
        (h_fin, c_fin), seq = lax.scan(step, (h0[layer], c0[layer]), seq)
        hs.append(h_fin)
        cs.append(c_fin)
    out = jnp.einsum('sbh,ho->sbo', seq, w_dec) + b_dec
    return out, (jnp.stack(hs), jnp.stack(cs))


if __name__ == "__main__":
    # config['network'] equivalents (small, deterministic)
    input_size, hidden_size, output_size, n_layers = 16, 32, 8, 2
    seq_len, batch = 8, 1          # init_hidden() implies batch = 1

    key = jax.random.PRNGKey(0)
    ks = jax.random.split(key, 9)

    # Deterministic synthetic parameters (stored pre-transposed: x @ W).
    scale = 0.1
    w_in = scale * jax.random.normal(ks[0], (input_size, hidden_size), jnp.float32)
    b_in = scale * jax.random.normal(ks[1], (1, hidden_size), jnp.float32)
    w_ih = scale * jax.random.normal(ks[2], (n_layers, hidden_size, 4 * hidden_size), jnp.float32)
    w_hh = scale * jax.random.normal(ks[3], (n_layers, hidden_size, 4 * hidden_size), jnp.float32)
    b_lstm = scale * jax.random.normal(ks[4], (n_layers, 1, 4 * hidden_size), jnp.float32)  # b_ih + b_hh
    w_dec = scale * jax.random.normal(ks[5], (hidden_size, output_size), jnp.float32)
    b_dec = scale * jax.random.normal(ks[6], (1, output_size), jnp.float32)

    # Inputs and initial hidden state (init_hidden() -> zeros).
    inp = jax.random.normal(ks[7], (seq_len, batch, input_size), jnp.float32)
    h0 = jnp.zeros((n_layers, batch, hidden_size), jnp.float32)
    c0 = jnp.zeros((n_layers, batch, hidden_size), jnp.float32)

    out, (hn, cn) = lstm_model_forward(inp, h0, c0, w_in, b_in, w_ih, w_hh,
                                       b_lstm, w_dec, b_dec)
    jax.block_until_ready((out, hn, cn))

    out_ref, (hn_ref, cn_ref) = reference_forward(inp, h0, c0, w_in, b_in,
                                                  w_ih, w_hh, b_lstm, w_dec, b_dec)
    assert out.shape == (seq_len, batch, output_size)
    assert hn.shape == (n_layers, batch, hidden_size)
    assert cn.shape == (n_layers, batch, hidden_size)
    assert jnp.allclose(out, out_ref, rtol=1e-4, atol=1e-4)
    assert jnp.allclose(hn, hn_ref, rtol=1e-4, atol=1e-4)
    assert jnp.allclose(cn, cn_ref, rtol=1e-4, atol=1e-4)

    print("KERNEL_OK")
</pallas_src>

<mosaic_0001>
module attributes {stable_mosaic.version = 11 : i64} {
  func.func @lstm_model_kernel(%arg0: memref<8x16xf32, #tpu.memory_space<vmem>>, %arg1: memref<16x32xf32, #tpu.memory_space<vmem>>, %arg2: memref<1x32xf32, #tpu.memory_space<vmem>>, %arg3: memref<2x32x128xf32, #tpu.memory_space<vmem>>, %arg4: memref<2x32x128xf32, #tpu.memory_space<vmem>>, %arg5: memref<2x1x128xf32, #tpu.memory_space<vmem>>, %arg6: memref<32x128xf32, #tpu.memory_space<vmem>>, %arg7: memref<1x128xf32, #tpu.memory_space<vmem>>, %arg8: memref<2x1x32xf32, #tpu.memory_space<vmem>>, %arg9: memref<2x1x32xf32, #tpu.memory_space<vmem>>, %arg10: memref<8x128xf32, #tpu.memory_space<vmem>>, %arg11: memref<2x1x32xf32, #tpu.memory_space<vmem>>, %arg12: memref<2x1x32xf32, #tpu.memory_space<vmem>>) attributes {dimension_semantics = [], scalar_prefetch = 0 : i64, scratch_operands = 0 : i64, tpu.core_type = #tpu.core_type<tc>} {
    %c0 = arith.constant 0 : index
    %c0_0 = arith.constant 0 : index
    %0 = vector.load %arg0[%c0, %c0_0] : memref<8x16xf32, #tpu.memory_space<vmem>>, vector<8x16xf32>
    %c0_1 = arith.constant 0 : index
    %c0_2 = arith.constant 0 : index
    %1 = vector.load %arg1[%c0_1, %c0_2] : memref<16x32xf32, #tpu.memory_space<vmem>>, vector<16x32xf32>
    %cst = arith.constant dense<0.000000e+00> : vector<8x32xf32>
    %2 = tpu.matmul %0, %1, %cst {dimension_numbers = #tpu.dot_dimension_numbers<[1], [0], [0], [1], [0, 0, 1, 1], [], []>} : vector<8x16xf32>, vector<16x32xf32>, vector<8x32xf32> -> vector<8x32xf32>
    %c0_3 = arith.constant 0 : index
    %c0_4 = arith.constant 0 : index
    %3 = vector.load %arg2[%c0_3, %c0_4] : memref<1x32xf32, #tpu.memory_space<vmem>>, vector<1x32xf32>
    %4 = vector.broadcast %3 : vector<1x32xf32> to vector<8x32xf32>
    %5 = arith.addf %2, %4 : vector<8x32xf32>
    %c0_5 = arith.constant 0 : index
    %c0_6 = arith.constant 0 : index
    %c0_7 = arith.constant 0 : index
    %6 = vector.load %arg3[%c0_5, %c0_6, %c0_7] : memref<2x32x128xf32, #tpu.memory_space<vmem>>, vector<1x32x128xf32>
    %7 = vector.shape_cast %6 : vector<1x32x128xf32> to vector<32x128xf32>
    %cst_8 = arith.constant dense<0.000000e+00> : vector<8x128xf32>
    %8 = tpu.matmul %5, %7, %cst_8 {dimension_numbers = #tpu.dot_dimension_numbers<[1], [0], [0], [1], [0, 0, 1, 1], [], []>} : vector<8x32xf32>, vector<32x128xf32>, vector<8x128xf32> -> vector<8x128xf32>
    %c0_9 = arith.constant 0 : index
    %c0_10 = arith.constant 0 : index
    %c0_11 = arith.constant 0 : index
    %9 = vector.load %arg5[%c0_9, %c0_10, %c0_11] : memref<2x1x128xf32, #tpu.memory_space<vmem>>, vector<1x1x128xf32>
    %10 = vector.shape_cast %9 : vector<1x1x128xf32> to vector<1x128xf32>
    %11 = vector.broadcast %10 : vector<1x128xf32> to vector<8x128xf32>
    %12 = arith.addf %8, %11 : vector<8x128xf32>
    %c0_12 = arith.constant 0 : index
    %c0_13 = arith.constant 0 : index
    %13 = vector.load %arg6[%c0_12, %c0_13] : memref<32x128xf32, #tpu.memory_space<vmem>>, vector<32x128xf32>
    %c0_14 = arith.constant 0 : index
    %c0_15 = arith.constant 0 : index
    %14 = vector.load %arg7[%c0_14, %c0_15] : memref<1x128xf32, #tpu.memory_space<vmem>>, vector<1x128xf32>
    %c0_16 = arith.constant 0 : index
    %c0_17 = arith.constant 0 : index
    %c0_18 = arith.constant 0 : index
    %15 = vector.load %arg4[%c0_16, %c0_17, %c0_18] : memref<2x32x128xf32, #tpu.memory_space<vmem>>, vector<1x32x128xf32>
    %16 = vector.shape_cast %15 : vector<1x32x128xf32> to vector<32x128xf32>
    %c0_19 = arith.constant 0 : index
    %c0_20 = arith.constant 0 : index
    %c0_21 = arith.constant 0 : index
    %17 = vector.load %arg8[%c0_19, %c0_20, %c0_21] : memref<2x1x32xf32, #tpu.memory_space<vmem>>, vector<1x1x32xf32>
    %18 = vector.shape_cast %17 : vector<1x1x32xf32> to vector<1x32xf32>
    %c0_22 = arith.constant 0 : index
    %c0_23 = arith.constant 0 : index
    %c0_24 = arith.constant 0 : index
    %19 = vector.load %arg9[%c0_22, %c0_23, %c0_24] : memref<2x1x32xf32, #tpu.memory_space<vmem>>, vector<1x1x32xf32>
    %20 = vector.shape_cast %19 : vector<1x1x32xf32> to vector<1x32xf32>
    %21 = vector.extract_strided_slice %12 {offsets = [0, 0], sizes = [1, 128], strides = [1, 1]} : vector<8x128xf32> to vector<1x128xf32>
    %cst_25 = arith.constant dense<0.000000e+00> : vector<1x128xf32>
    %22 = tpu.matmul %18, %16, %cst_25 {dimension_numbers = #tpu.dot_dimension_numbers<[1], [0], [0], [1], [0, 0, 1, 1], [], []>} : vector<1x32xf32>, vector<32x128xf32>, vector<1x128xf32> -> vector<1x128xf32>
    %23 = arith.addf %21, %22 : vector<1x128xf32>
    %24 = arith.negf %23 : vector<1x128xf32>
    %25 = math.exp %24 : vector<1x128xf32>
    %cst_26 = arith.constant 1.000000e+00 : f32
    %26 = vector.broadcast %cst_26 : f32 to vector<1x128xf32>
    %27 = arith.addf %26, %25 : vector<1x128xf32>
    %28 = arith.divf %26, %27 : vector<1x128xf32>
    %29 = vector.extract_strided_slice %28 {offsets = [0, 0], sizes = [1, 32], strides = [1, 1]} : vector<1x128xf32> to vector<1x32xf32>
    %30 = vector.extract_strided_slice %28 {offsets = [0, 32], sizes = [1, 32], strides = [1, 1]} : vector<1x128xf32> to vector<1x32xf32>
    %31 = vector.extract_strided_slice %28 {offsets = [0, 96], sizes = [1, 32], strides = [1, 1]} : vector<1x128xf32> to vector<1x32xf32>
    %32 = vector.extract_strided_slice %23 {offsets = [0, 64], sizes = [1, 32], strides = [1, 1]} : vector<1x128xf32> to vector<1x32xf32>
    %33 = math.tanh %32 : vector<1x32xf32>
    %34 = arith.mulf %30, %20 : vector<1x32xf32>
    %35 = arith.mulf %29, %33 : vector<1x32xf32>
    %36 = arith.addf %34, %35 : vector<1x32xf32>
    %37 = math.tanh %36 : vector<1x32xf32>
    %38 = arith.mulf %31, %37 : vector<1x32xf32>
    %39 = vector.extract_strided_slice %12 {offsets = [1, 0], sizes = [1, 128], strides = [1, 1]} : vector<8x128xf32> to vector<1x128xf32>
    %cst_27 = arith.constant dense<0.000000e+00> : vector<1x128xf32>
    %40 = tpu.matmul %38, %16, %cst_27 {dimension_numbers = #tpu.dot_dimension_numbers<[1], [0], [0], [1], [0, 0, 1, 1], [], []>} : vector<1x32xf32>, vector<32x128xf32>, vector<1x128xf32> -> vector<1x128xf32>
    %41 = arith.addf %39, %40 : vector<1x128xf32>
    %42 = arith.negf %41 : vector<1x128xf32>
    %43 = math.exp %42 : vector<1x128xf32>
    %cst_28 = arith.constant 1.000000e+00 : f32
    %44 = vector.broadcast %cst_28 : f32 to vector<1x128xf32>
    %45 = arith.addf %44, %43 : vector<1x128xf32>
    %46 = arith.divf %44, %45 : vector<1x128xf32>
    %47 = vector.extract_strided_slice %46 {offsets = [0, 0], sizes = [1, 32], strides = [1, 1]} : vector<1x128xf32> to vector<1x32xf32>
    %48 = vector.extract_strided_slice %46 {offsets = [0, 32], sizes = [1, 32], strides = [1, 1]} : vector<1x128xf32> to vector<1x32xf32>
    %49 = vector.extract_strided_slice %46 {offsets = [0, 96], sizes = [1, 32], strides = [1, 1]} : vector<1x128xf32> to vector<1x32xf32>
    %50 = vector.extract_strided_slice %41 {offsets = [0, 64], sizes = [1, 32], strides = [1, 1]} : vector<1x128xf32> to vector<1x32xf32>
    %51 = math.tanh %50 : vector<1x32xf32>
    %52 = arith.mulf %48, %36 : vector<1x32xf32>
    %53 = arith.mulf %47, %51 : vector<1x32xf32>
    %54 = arith.addf %52, %53 : vector<1x32xf32>
    %55 = math.tanh %54 : vector<1x32xf32>
    %56 = arith.mulf %49, %55 : vector<1x32xf32>
    %57 = vector.extract_strided_slice %12 {offsets = [2, 0], sizes = [1, 128], strides = [1, 1]} : vector<8x128xf32> to vector<1x128xf32>
    %cst_29 = arith.constant dense<0.000000e+00> : vector<1x128xf32>
    %58 = tpu.matmul %56, %16, %cst_29 {dimension_numbers = #tpu.dot_dimension_numbers<[1], [0], [0], [1], [0, 0, 1, 1], [], []>} : vector<1x32xf32>, vector<32x128xf32>, vector<1x128xf32> -> vector<1x128xf32>
    %59 = arith.addf %57, %58 : vector<1x128xf32>
    %60 = arith.negf %59 : vector<1x128xf32>
    %61 = math.exp %60 : vector<1x128xf32>
    %cst_30 = arith.constant 1.000000e+00 : f32
    %62 = vector.broadcast %cst_30 : f32 to vector<1x128xf32>
    %63 = arith.addf %62, %61 : vector<1x128xf32>
    %64 = arith.divf %62, %63 : vector<1x128xf32>
    %65 = vector.extract_strided_slice %64 {offsets = [0, 0], sizes = [1, 32], strides = [1, 1]} : vector<1x128xf32> to vector<1x32xf32>
    %66 = vector.extract_strided_slice %64 {offsets = [0, 32], sizes = [1, 32], strides = [1, 1]} : vector<1x128xf32> to vector<1x32xf32>
    %67 = vector.extract_strided_slice %64 {offsets = [0, 96], sizes = [1, 32], strides = [1, 1]} : vector<1x128xf32> to vector<1x32xf32>
    %68 = vector.extract_strided_slice %59 {offsets = [0, 64], sizes = [1, 32], strides = [1, 1]} : vector<1x128xf32> to vector<1x32xf32>
    %69 = math.tanh %68 : vector<1x32xf32>
    %70 = arith.mulf %66, %54 : vector<1x32xf32>
    %71 = arith.mulf %65, %69 : vector<1x32xf32>
    %72 = arith.addf %70, %71 : vector<1x32xf32>
    %73 = math.tanh %72 : vector<1x32xf32>
    %74 = arith.mulf %67, %73 : vector<1x32xf32>
    %75 = vector.extract_strided_slice %12 {offsets = [3, 0], sizes = [1, 128], strides = [1, 1]} : vector<8x128xf32> to vector<1x128xf32>
    %cst_31 = arith.constant dense<0.000000e+00> : vector<1x128xf32>
    %76 = tpu.matmul %74, %16, %cst_31 {dimension_numbers = #tpu.dot_dimension_numbers<[1], [0], [0], [1], [0, 0, 1, 1], [], []>} : vector<1x32xf32>, vector<32x128xf32>, vector<1x128xf32> -> vector<1x128xf32>
    %77 = arith.addf %75, %76 : vector<1x128xf32>
    %78 = arith.negf %77 : vector<1x128xf32>
    %79 = math.exp %78 : vector<1x128xf32>
    %cst_32 = arith.constant 1.000000e+00 : f32
    %80 = vector.broadcast %cst_32 : f32 to vector<1x128xf32>
    %81 = arith.addf %80, %79 : vector<1x128xf32>
    %82 = arith.divf %80, %81 : vector<1x128xf32>
    %83 = vector.extract_strided_slice %82 {offsets = [0, 0], sizes = [1, 32], strides = [1, 1]} : vector<1x128xf32> to vector<1x32xf32>
    %84 = vector.extract_strided_slice %82 {offsets = [0, 32], sizes = [1, 32], strides = [1, 1]} : vector<1x128xf32> to vector<1x32xf32>
    %85 = vector.extract_strided_slice %82 {offsets = [0, 96], sizes = [1, 32], strides = [1, 1]} : vector<1x128xf32> to vector<1x32xf32>
    %86 = vector.extract_strided_slice %77 {offsets = [0, 64], sizes = [1, 32], strides = [1, 1]} : vector<1x128xf32> to vector<1x32xf32>
    %87 = math.tanh %86 : vector<1x32xf32>
    %88 = arith.mulf %84, %72 : vector<1x32xf32>
    %89 = arith.mulf %83, %87 : vector<1x32xf32>
    %90 = arith.addf %88, %89 : vector<1x32xf32>
    %91 = math.tanh %90 : vector<1x32xf32>
    %92 = arith.mulf %85, %91 : vector<1x32xf32>
    %93 = vector.extract_strided_slice %12 {offsets = [4, 0], sizes = [1, 128], strides = [1, 1]} : vector<8x128xf32> to vector<1x128xf32>
    %cst_33 = arith.constant dense<0.000000e+00> : vector<1x128xf32>
    %94 = tpu.matmul %92, %16, %cst_33 {dimension_numbers = #tpu.dot_dimension_numbers<[1], [0], [0], [1], [0, 0, 1, 1], [], []>} : vector<1x32xf32>, vector<32x128xf32>, vector<1x128xf32> -> vector<1x128xf32>
    %95 = arith.addf %93, %94 : vector<1x128xf32>
    %96 = arith.negf %95 : vector<1x128xf32>
    %97 = math.exp %96 : vector<1x128xf32>
    %cst_34 = arith.constant 1.000000e+00 : f32
    %98 = vector.broadcast %cst_34 : f32 to vector<1x128xf32>
    %99 = arith.addf %98, %97 : vector<1x128xf32>
    %100 = arith.divf %98, %99 : vector<1x128xf32>
    %101 = vector.extract_strided_slice %100 {offsets = [0, 0], sizes = [1, 32], strides = [1, 1]} : vector<1x128xf32> to vector<1x32xf32>
    %102 = vector.extract_strided_slice %100 {offsets = [0, 32], sizes = [1, 32], strides = [1, 1]} : vector<1x128xf32> to vector<1x32xf32>
    %103 = vector.extract_strided_slice %100 {offsets = [0, 96], sizes = [1, 32], strides = [1, 1]} : vector<1x128xf32> to vector<1x32xf32>
    %104 = vector.extract_strided_slice %95 {offsets = [0, 64], sizes = [1, 32], strides = [1, 1]} : vector<1x128xf32> to vector<1x32xf32>
    %105 = math.tanh %104 : vector<1x32xf32>
    %106 = arith.mulf %102, %90 : vector<1x32xf32>
    %107 = arith.mulf %101, %105 : vector<1x32xf32>
    %108 = arith.addf %106, %107 : vector<1x32xf32>
    %109 = math.tanh %108 : vector<1x32xf32>
    %110 = arith.mulf %103, %109 : vector<1x32xf32>
    %111 = vector.extract_strided_slice %12 {offsets = [5, 0], sizes = [1, 128], strides = [1, 1]} : vector<8x128xf32> to vector<1x128xf32>
    %cst_35 = arith.constant dense<0.000000e+00> : vector<1x128xf32>
    %112 = tpu.matmul %110, %16, %cst_35 {dimension_numbers = #tpu.dot_dimension_numbers<[1], [0], [0], [1], [0, 0, 1, 1], [], []>} : vector<1x32xf32>, vector<32x128xf32>, vector<1x128xf32> -> vector<1x128xf32>
    %113 = arith.addf %111, %112 : vector<1x128xf32>
    %114 = arith.negf %113 : vector<1x128xf32>
    %115 = math.exp %114 : vector<1x128xf32>
    %cst_36 = arith.constant 1.000000e+00 : f32
    %116 = vector.broadcast %cst_36 : f32 to vector<1x128xf32>
    %117 = arith.addf %116, %115 : vector<1x128xf32>
    %118 = arith.divf %116, %117 : vector<1x128xf32>
    %119 = vector.extract_strided_slice %118 {offsets = [0, 0], sizes = [1, 32], strides = [1, 1]} : vector<1x128xf32> to vector<1x32xf32>
    %120 = vector.extract_strided_slice %118 {offsets = [0, 32], sizes = [1, 32], strides = [1, 1]} : vector<1x128xf32> to vector<1x32xf32>
    %121 = vector.extract_strided_slice %118 {offsets = [0, 96], sizes = [1, 32], strides = [1, 1]} : vector<1x128xf32> to vector<1x32xf32>
    %122 = vector.extract_strided_slice %113 {offsets = [0, 64], sizes = [1, 32], strides = [1, 1]} : vector<1x128xf32> to vector<1x32xf32>
    %123 = math.tanh %122 : vector<1x32xf32>
    %124 = arith.mulf %120, %108 : vector<1x32xf32>
    %125 = arith.mulf %119, %123 : vector<1x32xf32>
    %126 = arith.addf %124, %125 : vector<1x32xf32>
    %127 = math.tanh %126 : vector<1x32xf32>
    %128 = arith.mulf %121, %127 : vector<1x32xf32>
    %129 = vector.extract_strided_slice %12 {offsets = [6, 0], sizes = [1, 128], strides = [1, 1]} : vector<8x128xf32> to vector<1x128xf32>
    %cst_37 = arith.constant dense<0.000000e+00> : vector<1x128xf32>
    %130 = tpu.matmul %128, %16, %cst_37 {dimension_numbers = #tpu.dot_dimension_numbers<[1], [0], [0], [1], [0, 0, 1, 1], [], []>} : vector<1x32xf32>, vector<32x128xf32>, vector<1x128xf32> -> vector<1x128xf32>
    %131 = arith.addf %129, %130 : vector<1x128xf32>
    %132 = arith.negf %131 : vector<1x128xf32>
    %133 = math.exp %132 : vector<1x128xf32>
    %cst_38 = arith.constant 1.000000e+00 : f32
    %134 = vector.broadcast %cst_38 : f32 to vector<1x128xf32>
    %135 = arith.addf %134, %133 : vector<1x128xf32>
    %136 = arith.divf %134, %135 : vector<1x128xf32>
    %137 = vector.extract_strided_slice %136 {offsets = [0, 0], sizes = [1, 32], strides = [1, 1]} : vector<1x128xf32> to vector<1x32xf32>
    %138 = vector.extract_strided_slice %136 {offsets = [0, 32], sizes = [1, 32], strides = [1, 1]} : vector<1x128xf32> to vector<1x32xf32>
    %139 = vector.extract_strided_slice %136 {offsets = [0, 96], sizes = [1, 32], strides = [1, 1]} : vector<1x128xf32> to vector<1x32xf32>
    %140 = vector.extract_strided_slice %131 {offsets = [0, 64], sizes = [1, 32], strides = [1, 1]} : vector<1x128xf32> to vector<1x32xf32>
    %141 = math.tanh %140 : vector<1x32xf32>
    %142 = arith.mulf %138, %126 : vector<1x32xf32>
    %143 = arith.mulf %137, %141 : vector<1x32xf32>
    %144 = arith.addf %142, %143 : vector<1x32xf32>
    %145 = math.tanh %144 : vector<1x32xf32>
    %146 = arith.mulf %139, %145 : vector<1x32xf32>
    %147 = vector.extract_strided_slice %12 {offsets = [7, 0], sizes = [1, 128], strides = [1, 1]} : vector<8x128xf32> to vector<1x128xf32>
    %cst_39 = arith.constant dense<0.000000e+00> : vector<1x128xf32>
    %148 = tpu.matmul %146, %16, %cst_39 {dimension_numbers = #tpu.dot_dimension_numbers<[1], [0], [0], [1], [0, 0, 1, 1], [], []>} : vector<1x32xf32>, vector<32x128xf32>, vector<1x128xf32> -> vector<1x128xf32>
    %149 = arith.addf %147, %148 : vector<1x128xf32>
    %150 = arith.negf %149 : vector<1x128xf32>
    %151 = math.exp %150 : vector<1x128xf32>
    %cst_40 = arith.constant 1.000000e+00 : f32
    %152 = vector.broadcast %cst_40 : f32 to vector<1x128xf32>
    %153 = arith.addf %152, %151 : vector<1x128xf32>
    %154 = arith.divf %152, %153 : vector<1x128xf32>
    %155 = vector.extract_strided_slice %154 {offsets = [0, 0], sizes = [1, 32], strides = [1, 1]} : vector<1x128xf32> to vector<1x32xf32>
    %156 = vector.extract_strided_slice %154 {offsets = [0, 32], sizes = [1, 32], strides = [1, 1]} : vector<1x128xf32> to vector<1x32xf32>
    %157 = vector.extract_strided_slice %154 {offsets = [0, 96], sizes = [1, 32], strides = [1, 1]} : vector<1x128xf32> to vector<1x32xf32>
    %158 = vector.extract_strided_slice %149 {offsets = [0, 64], sizes = [1, 32], strides = [1, 1]} : vector<1x128xf32> to vector<1x32xf32>
    %159 = math.tanh %158 : vector<1x32xf32>
    %160 = arith.mulf %156, %144 : vector<1x32xf32>
    %161 = arith.mulf %155, %159 : vector<1x32xf32>
    %162 = arith.addf %160, %161 : vector<1x32xf32>
    %163 = math.tanh %162 : vector<1x32xf32>
    %164 = arith.mulf %157, %163 : vector<1x32xf32>
    %c0_41 = arith.constant 0 : index
    %c0_42 = arith.constant 0 : index
    %c0_43 = arith.constant 0 : index
    %165 = vector.load %arg11[%c0_41, %c0_42, %c0_43] : memref<2x1x32xf32, #tpu.memory_space<vmem>>, vector<1x1x32xf32>
    %166 = vector.shape_cast %165 : vector<1x1x32xf32> to vector<1x32xf32>
    %167 = vector.shape_cast %164 : vector<1x32xf32> to vector<1x1x32xf32>
    tpu.vector_store %arg11[%c0_41, %c0_42, %c0_43], %167 {strides = array<i32>} : memref<2x1x32xf32, #tpu.memory_space<vmem>>, vector<1x1x32xf32>,
    %c0_44 = arith.constant 0 : index
    %c0_45 = arith.constant 0 : index
    %c0_46 = arith.constant 0 : index
    %168 = vector.load %arg12[%c0_44, %c0_45, %c0_46] : memref<2x1x32xf32, #tpu.memory_space<vmem>>, vector<1x1x32xf32>
    %169 = vector.shape_cast %168 : vector<1x1x32xf32> to vector<1x32xf32>
    %170 = vector.shape_cast %162 : vector<1x32xf32> to vector<1x1x32xf32>
    tpu.vector_store %arg12[%c0_44, %c0_45, %c0_46], %170 {strides = array<i32>} : memref<2x1x32xf32, #tpu.memory_space<vmem>>, vector<1x1x32xf32>,
    %c1 = arith.constant 1 : index
    %c0_47 = arith.constant 0 : index
    %c0_48 = arith.constant 0 : index
    %171 = vector.load %arg4[%c1, %c0_47, %c0_48] : memref<2x32x128xf32, #tpu.memory_space<vmem>>, vector<1x32x128xf32>
    %172 = vector.shape_cast %171 : vector<1x32x128xf32> to vector<32x128xf32>
    %c1_49 = arith.constant 1 : index
    %c0_50 = arith.constant 0 : index
    %c0_51 = arith.constant 0 : index
    %173 = vector.load %arg3[%c1_49, %c0_50, %c0_51] : memref<2x32x128xf32, #tpu.memory_space<vmem>>, vector<1x32x128xf32>
    %174 = vector.shape_cast %173 : vector<1x32x128xf32> to vector<32x128xf32>
    %c1_52 = arith.constant 1 : index
    %c0_53 = arith.constant 0 : index
    %c0_54 = arith.constant 0 : index
    %175 = vector.load %arg5[%c1_52, %c0_53, %c0_54] : memref<2x1x128xf32, #tpu.memory_space<vmem>>, vector<1x1x128xf32>
    %176 = vector.shape_cast %175 : vector<1x1x128xf32> to vector<1x128xf32>
    %c1_55 = arith.constant 1 : index
    %c0_56 = arith.constant 0 : index
    %c0_57 = arith.constant 0 : index
    %177 = vector.load %arg8[%c1_55, %c0_56, %c0_57] : memref<2x1x32xf32, #tpu.memory_space<vmem>>, vector<1x1x32xf32>
    %178 = vector.shape_cast %177 : vector<1x1x32xf32> to vector<1x32xf32>
    %c1_58 = arith.constant 1 : index
    %c0_59 = arith.constant 0 : index
    %c0_60 = arith.constant 0 : index
    %179 = vector.load %arg9[%c1_58, %c0_59, %c0_60] : memref<2x1x32xf32, #tpu.memory_space<vmem>>, vector<1x1x32xf32>
    %180 = vector.shape_cast %179 : vector<1x1x32xf32> to vector<1x32xf32>
    %cst_61 = arith.constant dense<0.000000e+00> : vector<1x128xf32>
    %181 = tpu.matmul %38, %174, %cst_61 {dimension_numbers = #tpu.dot_dimension_numbers<[1], [0], [0], [1], [0, 0, 1, 1], [], []>} : vector<1x32xf32>, vector<32x128xf32>, vector<1x128xf32> -> vector<1x128xf32>
    %182 = arith.addf %181, %176 : vector<1x128xf32>
    %cst_62 = arith.constant dense<0.000000e+00> : vector<1x128xf32>
    %183 = tpu.matmul %178, %172, %cst_62 {dimension_numbers = #tpu.dot_dimension_numbers<[1], [0], [0], [1], [0, 0, 1, 1], [], []>} : vector<1x32xf32>, vector<32x128xf32>, vector<1x128xf32> -> vector<1x128xf32>
    %184 = arith.addf %182, %183 : vector<1x128xf32>
    %185 = arith.negf %184 : vector<1x128xf32>
    %186 = math.exp %185 : vector<1x128xf32>
    %cst_63 = arith.constant 1.000000e+00 : f32
    %187 = vector.broadcast %cst_63 : f32 to vector<1x128xf32>
    %188 = arith.addf %187, %186 : vector<1x128xf32>
    %189 = arith.divf %187, %188 : vector<1x128xf32>
    %190 = vector.extract_strided_slice %189 {offsets = [0, 0], sizes = [1, 32], strides = [1, 1]} : vector<1x128xf32> to vector<1x32xf32>
    %191 = vector.extract_strided_slice %189 {offsets = [0, 32], sizes = [1, 32], strides = [1, 1]} : vector<1x128xf32> to vector<1x32xf32>
    %192 = vector.extract_strided_slice %189 {offsets = [0, 96], sizes = [1, 32], strides = [1, 1]} : vector<1x128xf32> to vector<1x32xf32>
    %193 = vector.extract_strided_slice %184 {offsets = [0, 64], sizes = [1, 32], strides = [1, 1]} : vector<1x128xf32> to vector<1x32xf32>
    %194 = math.tanh %193 : vector<1x32xf32>
    %195 = arith.mulf %191, %180 : vector<1x32xf32>
    %196 = arith.mulf %190, %194 : vector<1x32xf32>
    %197 = arith.addf %195, %196 : vector<1x32xf32>
    %198 = math.tanh %197 : vector<1x32xf32>
    %199 = arith.mulf %192, %198 : vector<1x32xf32>
    %cst_64 = arith.constant dense<0.000000e+00> : vector<1x128xf32>
    %200 = tpu.matmul %199, %13, %cst_64 {dimension_numbers = #tpu.dot_dimension_numbers<[1], [0], [0], [1], [0, 0, 1, 1], [], []>} : vector<1x32xf32>, vector<32x128xf32>, vector<1x128xf32> -> vector<1x128xf32>
    %201 = arith.addf %200, %14 : vector<1x128xf32>
    %c0_65 = arith.constant 0 : index
    %c0_66 = arith.constant 0 : index
    %202 = vector.load %arg10[%c0_65, %c0_66] : memref<8x128xf32, #tpu.memory_space<vmem>>, vector<1x128xf32>
    tpu.vector_store %arg10[%c0_65, %c0_66], %201 {strides = array<i32>} : memref<8x128xf32, #tpu.memory_space<vmem>>, vector<1x128xf32>,
    %cst_67 = arith.constant dense<0.000000e+00> : vector<1x128xf32>
    %203 = tpu.matmul %56, %174, %cst_67 {dimension_numbers = #tpu.dot_dimension_numbers<[1], [0], [0], [1], [0, 0, 1, 1], [], []>} : vector<1x32xf32>, vector<32x128xf32>, vector<1x128xf32> -> vector<1x128xf32>
    %204 = arith.addf %203, %176 : vector<1x128xf32>
    %cst_68 = arith.constant dense<0.000000e+00> : vector<1x128xf32>
    %205 = tpu.matmul %199, %172, %cst_68 {dimension_numbers = #tpu.dot_dimension_numbers<[1], [0], [0], [1], [0, 0, 1, 1], [], []>} : vector<1x32xf32>, vector<32x128xf32>, vector<1x128xf32> -> vector<1x128xf32>
    %206 = arith.addf %204, %205 : vector<1x128xf32>
    %207 = arith.negf %206 : vector<1x128xf32>
    %208 = math.exp %207 : vector<1x128xf32>
    %cst_69 = arith.constant 1.000000e+00 : f32
    %209 = vector.broadcast %cst_69 : f32 to vector<1x128xf32>
    %210 = arith.addf %209, %208 : vector<1x128xf32>
    %211 = arith.divf %209, %210 : vector<1x128xf32>
    %212 = vector.extract_strided_slice %211 {offsets = [0, 0], sizes = [1, 32], strides = [1, 1]} : vector<1x128xf32> to vector<1x32xf32>
    %213 = vector.extract_strided_slice %211 {offsets = [0, 32], sizes = [1, 32], strides = [1, 1]} : vector<1x128xf32> to vector<1x32xf32>
    %214 = vector.extract_strided_slice %211 {offsets = [0, 96], sizes = [1, 32], strides = [1, 1]} : vector<1x128xf32> to vector<1x32xf32>
    %215 = vector.extract_strided_slice %206 {offsets = [0, 64], sizes = [1, 32], strides = [1, 1]} : vector<1x128xf32> to vector<1x32xf32>
    %216 = math.tanh %215 : vector<1x32xf32>
    %217 = arith.mulf %213, %197 : vector<1x32xf32>
    %218 = arith.mulf %212, %216 : vector<1x32xf32>
    %219 = arith.addf %217, %218 : vector<1x32xf32>
    %220 = math.tanh %219 : vector<1x32xf32>
    %221 = arith.mulf %214, %220 : vector<1x32xf32>
    %cst_70 = arith.constant dense<0.000000e+00> : vector<1x128xf32>
    %222 = tpu.matmul %221, %13, %cst_70 {dimension_numbers = #tpu.dot_dimension_numbers<[1], [0], [0], [1], [0, 0, 1, 1], [], []>} : vector<1x32xf32>, vector<32x128xf32>, vector<1x128xf32> -> vector<1x128xf32>
    %223 = arith.addf %222, %14 : vector<1x128xf32>
    %c1_71 = arith.constant 1 : index
    %c0_72 = arith.constant 0 : index
    %224 = vector.load %arg10[%c1_71, %c0_72] : memref<8x128xf32, #tpu.memory_space<vmem>>, vector<1x128xf32>
    tpu.vector_store %arg10[%c1_71, %c0_72], %223 {strides = array<i32>} : memref<8x128xf32, #tpu.memory_space<vmem>>, vector<1x128xf32>,
    %cst_73 = arith.constant dense<0.000000e+00> : vector<1x128xf32>
    %225 = tpu.matmul %74, %174, %cst_73 {dimension_numbers = #tpu.dot_dimension_numbers<[1], [0], [0], [1], [0, 0, 1, 1], [], []>} : vector<1x32xf32>, vector<32x128xf32>, vector<1x128xf32> -> vector<1x128xf32>
    %226 = arith.addf %225, %176 : vector<1x128xf32>
    %cst_74 = arith.constant dense<0.000000e+00> : vector<1x128xf32>
    %227 = tpu.matmul %221, %172, %cst_74 {dimension_numbers = #tpu.dot_dimension_numbers<[1], [0], [0], [1], [0, 0, 1, 1], [], []>} : vector<1x32xf32>, vector<32x128xf32>, vector<1x128xf32> -> vector<1x128xf32>
    %228 = arith.addf %226, %227 : vector<1x128xf32>
    %229 = arith.negf %228 : vector<1x128xf32>
    %230 = math.exp %229 : vector<1x128xf32>
    %cst_75 = arith.constant 1.000000e+00 : f32
    %231 = vector.broadcast %cst_75 : f32 to vector<1x128xf32>
    %232 = arith.addf %231, %230 : vector<1x128xf32>
    %233 = arith.divf %231, %232 : vector<1x128xf32>
    %234 = vector.extract_strided_slice %233 {offsets = [0, 0], sizes = [1, 32], strides = [1, 1]} : vector<1x128xf32> to vector<1x32xf32>
    %235 = vector.extract_strided_slice %233 {offsets = [0, 32], sizes = [1, 32], strides = [1, 1]} : vector<1x128xf32> to vector<1x32xf32>
    %236 = vector.extract_strided_slice %233 {offsets = [0, 96], sizes = [1, 32], strides = [1, 1]} : vector<1x128xf32> to vector<1x32xf32>
    %237 = vector.extract_strided_slice %228 {offsets = [0, 64], sizes = [1, 32], strides = [1, 1]} : vector<1x128xf32> to vector<1x32xf32>
    %238 = math.tanh %237 : vector<1x32xf32>
    %239 = arith.mulf %235, %219 : vector<1x32xf32>
    %240 = arith.mulf %234, %238 : vector<1x32xf32>
    %241 = arith.addf %239, %240 : vector<1x32xf32>
    %242 = math.tanh %241 : vector<1x32xf32>
    %243 = arith.mulf %236, %242 : vector<1x32xf32>
    %cst_76 = arith.constant dense<0.000000e+00> : vector<1x128xf32>
    %244 = tpu.matmul %243, %13, %cst_76 {dimension_numbers = #tpu.dot_dimension_numbers<[1], [0], [0], [1], [0, 0, 1, 1], [], []>} : vector<1x32xf32>, vector<32x128xf32>, vector<1x128xf32> -> vector<1x128xf32>
    %245 = arith.addf %244, %14 : vector<1x128xf32>
    %c2 = arith.constant 2 : index
    %c0_77 = arith.constant 0 : index
    %246 = vector.load %arg10[%c2, %c0_77] : memref<8x128xf32, #tpu.memory_space<vmem>>, vector<1x128xf32>
    tpu.vector_store %arg10[%c2, %c0_77], %245 {strides = array<i32>} : memref<8x128xf32, #tpu.memory_space<vmem>>, vector<1x128xf32>,
    %cst_78 = arith.constant dense<0.000000e+00> : vector<1x128xf32>
    %247 = tpu.matmul %92, %174, %cst_78 {dimension_numbers = #tpu.dot_dimension_numbers<[1], [0], [0], [1], [0, 0, 1, 1], [], []>} : vector<1x32xf32>, vector<32x128xf32>, vector<1x128xf32> -> vector<1x128xf32>
    %248 = arith.addf %247, %176 : vector<1x128xf32>
    %cst_79 = arith.constant dense<0.000000e+00> : vector<1x128xf32>
    %249 = tpu.matmul %243, %172, %cst_79 {dimension_numbers = #tpu.dot_dimension_numbers<[1], [0], [0], [1], [0, 0, 1, 1], [], []>} : vector<1x32xf32>, vector<32x128xf32>, vector<1x128xf32> -> vector<1x128xf32>
    %250 = arith.addf %248, %249 : vector<1x128xf32>
    %251 = arith.negf %250 : vector<1x128xf32>
    %252 = math.exp %251 : vector<1x128xf32>
    %cst_80 = arith.constant 1.000000e+00 : f32
    %253 = vector.broadcast %cst_80 : f32 to vector<1x128xf32>
    %254 = arith.addf %253, %252 : vector<1x128xf32>
    %255 = arith.divf %253, %254 : vector<1x128xf32>
    %256 = vector.extract_strided_slice %255 {offsets = [0, 0], sizes = [1, 32], strides = [1, 1]} : vector<1x128xf32> to vector<1x32xf32>
    %257 = vector.extract_strided_slice %255 {offsets = [0, 32], sizes = [1, 32], strides = [1, 1]} : vector<1x128xf32> to vector<1x32xf32>
    %258 = vector.extract_strided_slice %255 {offsets = [0, 96], sizes = [1, 32], strides = [1, 1]} : vector<1x128xf32> to vector<1x32xf32>
    %259 = vector.extract_strided_slice %250 {offsets = [0, 64], sizes = [1, 32], strides = [1, 1]} : vector<1x128xf32> to vector<1x32xf32>
    %260 = math.tanh %259 : vector<1x32xf32>
    %261 = arith.mulf %257, %241 : vector<1x32xf32>
    %262 = arith.mulf %256, %260 : vector<1x32xf32>
    %263 = arith.addf %261, %262 : vector<1x32xf32>
    %264 = math.tanh %263 : vector<1x32xf32>
    %265 = arith.mulf %258, %264 : vector<1x32xf32>
    %cst_81 = arith.constant dense<0.000000e+00> : vector<1x128xf32>
    %266 = tpu.matmul %265, %13, %cst_81 {dimension_numbers = #tpu.dot_dimension_numbers<[1], [0], [0], [1], [0, 0, 1, 1], [], []>} : vector<1x32xf32>, vector<32x128xf32>, vector<1x128xf32> -> vector<1x128xf32>
    %267 = arith.addf %266, %14 : vector<1x128xf32>
    %c3 = arith.constant 3 : index
    %c0_82 = arith.constant 0 : index
    %268 = vector.load %arg10[%c3, %c0_82] : memref<8x128xf32, #tpu.memory_space<vmem>>, vector<1x128xf32>
    tpu.vector_store %arg10[%c3, %c0_82], %267 {strides = array<i32>} : memref<8x128xf32, #tpu.memory_space<vmem>>, vector<1x128xf32>,
    %cst_83 = arith.constant dense<0.000000e+00> : vector<1x128xf32>
    %269 = tpu.matmul %110, %174, %cst_83 {dimension_numbers = #tpu.dot_dimension_numbers<[1], [0], [0], [1], [0, 0, 1, 1], [], []>} : vector<1x32xf32>, vector<32x128xf32>, vector<1x128xf32> -> vector<1x128xf32>
    %270 = arith.addf %269, %176 : vector<1x128xf32>
    %cst_84 = arith.constant dense<0.000000e+00> : vector<1x128xf32>
    %271 = tpu.matmul %265, %172, %cst_84 {dimension_numbers = #tpu.dot_dimension_numbers<[1], [0], [0], [1], [0, 0, 1, 1], [], []>} : vector<1x32xf32>, vector<32x128xf32>, vector<1x128xf32> -> vector<1x128xf32>
    %272 = arith.addf %270, %271 : vector<1x128xf32>
    %273 = arith.negf %272 : vector<1x128xf32>
    %274 = math.exp %273 : vector<1x128xf32>
    %cst_85 = arith.constant 1.000000e+00 : f32
    %275 = vector.broadcast %cst_85 : f32 to vector<1x128xf32>
    %276 = arith.addf %275, %274 : vector<1x128xf32>
    %277 = arith.divf %275, %276 : vector<1x128xf32>
    %278 = vector.extract_strided_slice %277 {offsets = [0, 0], sizes = [1, 32], strides = [1, 1]} : vector<1x128xf32> to vector<1x32xf32>
    %279 = vector.extract_strided_slice %277 {offsets = [0, 32], sizes = [1, 32], strides = [1, 1]} : vector<1x128xf32> to vector<1x32xf32>
    %280 = vector.extract_strided_slice %277 {offsets = [0, 96], sizes = [1, 32], strides = [1, 1]} : vector<1x128xf32> to vector<1x32xf32>
    %281 = vector.extract_strided_slice %272 {offsets = [0, 64], sizes = [1, 32], strides = [1, 1]} : vector<1x128xf32> to vector<1x32xf32>
    %282 = math.tanh %281 : vector<1x32xf32>
    %283 = arith.mulf %279, %263 : vector<1x32xf32>
    %284 = arith.mulf %278, %282 : vector<1x32xf32>
    %285 = arith.addf %283, %284 : vector<1x32xf32>
    %286 = math.tanh %285 : vector<1x32xf32>
    %287 = arith.mulf %280, %286 : vector<1x32xf32>
    %cst_86 = arith.constant dense<0.000000e+00> : vector<1x128xf32>
    %288 = tpu.matmul %287, %13, %cst_86 {dimension_numbers = #tpu.dot_dimension_numbers<[1], [0], [0], [1], [0, 0, 1, 1], [], []>} : vector<1x32xf32>, vector<32x128xf32>, vector<1x128xf32> -> vector<1x128xf32>
    %289 = arith.addf %288, %14 : vector<1x128xf32>
    %c4 = arith.constant 4 : index
    %c0_87 = arith.constant 0 : index
    %290 = vector.load %arg10[%c4, %c0_87] : memref<8x128xf32, #tpu.memory_space<vmem>>, vector<1x128xf32>
    tpu.vector_store %arg10[%c4, %c0_87], %289 {strides = array<i32>} : memref<8x128xf32, #tpu.memory_space<vmem>>, vector<1x128xf32>,
    %cst_88 = arith.constant dense<0.000000e+00> : vector<1x128xf32>
    %291 = tpu.matmul %128, %174, %cst_88 {dimension_numbers = #tpu.dot_dimension_numbers<[1], [0], [0], [1], [0, 0, 1, 1], [], []>} : vector<1x32xf32>, vector<32x128xf32>, vector<1x128xf32> -> vector<1x128xf32>
    %292 = arith.addf %291, %176 : vector<1x128xf32>
    %cst_89 = arith.constant dense<0.000000e+00> : vector<1x128xf32>
    %293 = tpu.matmul %287, %172, %cst_89 {dimension_numbers = #tpu.dot_dimension_numbers<[1], [0], [0], [1], [0, 0, 1, 1], [], []>} : vector<1x32xf32>, vector<32x128xf32>, vector<1x128xf32> -> vector<1x128xf32>
    %294 = arith.addf %292, %293 : vector<1x128xf32>
    %295 = arith.negf %294 : vector<1x128xf32>
    %296 = math.exp %295 : vector<1x128xf32>
    %cst_90 = arith.constant 1.000000e+00 : f32
    %297 = vector.broadcast %cst_90 : f32 to vector<1x128xf32>
    %298 = arith.addf %297, %296 : vector<1x128xf32>
    %299 = arith.divf %297, %298 : vector<1x128xf32>
    %300 = vector.extract_strided_slice %299 {offsets = [0, 0], sizes = [1, 32], strides = [1, 1]} : vector<1x128xf32> to vector<1x32xf32>
    %301 = vector.extract_strided_slice %299 {offsets = [0, 32], sizes = [1, 32], strides = [1, 1]} : vector<1x128xf32> to vector<1x32xf32>
    %302 = vector.extract_strided_slice %299 {offsets = [0, 96], sizes = [1, 32], strides = [1, 1]} : vector<1x128xf32> to vector<1x32xf32>
    %303 = vector.extract_strided_slice %294 {offsets = [0, 64], sizes = [1, 32], strides = [1, 1]} : vector<1x128xf32> to vector<1x32xf32>
    %304 = math.tanh %303 : vector<1x32xf32>
    %305 = arith.mulf %301, %285 : vector<1x32xf32>
    %306 = arith.mulf %300, %304 : vector<1x32xf32>
    %307 = arith.addf %305, %306 : vector<1x32xf32>
    %308 = math.tanh %307 : vector<1x32xf32>
    %309 = arith.mulf %302, %308 : vector<1x32xf32>
    %cst_91 = arith.constant dense<0.000000e+00> : vector<1x128xf32>
    %310 = tpu.matmul %309, %13, %cst_91 {dimension_numbers = #tpu.dot_dimension_numbers<[1], [0], [0], [1], [0, 0, 1, 1], [], []>} : vector<1x32xf32>, vector<32x128xf32>, vector<1x128xf32> -> vector<1x128xf32>
    %311 = arith.addf %310, %14 : vector<1x128xf32>
    %c5 = arith.constant 5 : index
    %c0_92 = arith.constant 0 : index
    %312 = vector.load %arg10[%c5, %c0_92] : memref<8x128xf32, #tpu.memory_space<vmem>>, vector<1x128xf32>
    tpu.vector_store %arg10[%c5, %c0_92], %311 {strides = array<i32>} : memref<8x128xf32, #tpu.memory_space<vmem>>, vector<1x128xf32>,
    %cst_93 = arith.constant dense<0.000000e+00> : vector<1x128xf32>
    %313 = tpu.matmul %146, %174, %cst_93 {dimension_numbers = #tpu.dot_dimension_numbers<[1], [0], [0], [1], [0, 0, 1, 1], [], []>} : vector<1x32xf32>, vector<32x128xf32>, vector<1x128xf32> -> vector<1x128xf32>
    %314 = arith.addf %313, %176 : vector<1x128xf32>
    %cst_94 = arith.constant dense<0.000000e+00> : vector<1x128xf32>
    %315 = tpu.matmul %309, %172, %cst_94 {dimension_numbers = #tpu.dot_dimension_numbers<[1], [0], [0], [1], [0, 0, 1, 1], [], []>} : vector<1x32xf32>, vector<32x128xf32>, vector<1x128xf32> -> vector<1x128xf32>
    %316 = arith.addf %314, %315 : vector<1x128xf32>
    %317 = arith.negf %316 : vector<1x128xf32>
    %318 = math.exp %317 : vector<1x128xf32>
    %cst_95 = arith.constant 1.000000e+00 : f32
    %319 = vector.broadcast %cst_95 : f32 to vector<1x128xf32>
    %320 = arith.addf %319, %318 : vector<1x128xf32>
    %321 = arith.divf %319, %320 : vector<1x128xf32>
    %322 = vector.extract_strided_slice %321 {offsets = [0, 0], sizes = [1, 32], strides = [1, 1]} : vector<1x128xf32> to vector<1x32xf32>
    %323 = vector.extract_strided_slice %321 {offsets = [0, 32], sizes = [1, 32], strides = [1, 1]} : vector<1x128xf32> to vector<1x32xf32>
    %324 = vector.extract_strided_slice %321 {offsets = [0, 96], sizes = [1, 32], strides = [1, 1]} : vector<1x128xf32> to vector<1x32xf32>
    %325 = vector.extract_strided_slice %316 {offsets = [0, 64], sizes = [1, 32], strides = [1, 1]} : vector<1x128xf32> to vector<1x32xf32>
    %326 = math.tanh %325 : vector<1x32xf32>
    %327 = arith.mulf %323, %307 : vector<1x32xf32>
    %328 = arith.mulf %322, %326 : vector<1x32xf32>
    %329 = arith.addf %327, %328 : vector<1x32xf32>
    %330 = math.tanh %329 : vector<1x32xf32>
    %331 = arith.mulf %324, %330 : vector<1x32xf32>
    %cst_96 = arith.constant dense<0.000000e+00> : vector<1x128xf32>
    %332 = tpu.matmul %331, %13, %cst_96 {dimension_numbers = #tpu.dot_dimension_numbers<[1], [0], [0], [1], [0, 0, 1, 1], [], []>} : vector<1x32xf32>, vector<32x128xf32>, vector<1x128xf32> -> vector<1x128xf32>
    %333 = arith.addf %332, %14 : vector<1x128xf32>
    %c6 = arith.constant 6 : index
    %c0_97 = arith.constant 0 : index
    %334 = vector.load %arg10[%c6, %c0_97] : memref<8x128xf32, #tpu.memory_space<vmem>>, vector<1x128xf32>
    tpu.vector_store %arg10[%c6, %c0_97], %333 {strides = array<i32>} : memref<8x128xf32, #tpu.memory_space<vmem>>, vector<1x128xf32>,
    %cst_98 = arith.constant dense<0.000000e+00> : vector<1x128xf32>
    %335 = tpu.matmul %164, %174, %cst_98 {dimension_numbers = #tpu.dot_dimension_numbers<[1], [0], [0], [1], [0, 0, 1, 1], [], []>} : vector<1x32xf32>, vector<32x128xf32>, vector<1x128xf32> -> vector<1x128xf32>
    %336 = arith.addf %335, %176 : vector<1x128xf32>
    %cst_99 = arith.constant dense<0.000000e+00> : vector<1x128xf32>
    %337 = tpu.matmul %331, %172, %cst_99 {dimension_numbers = #tpu.dot_dimension_numbers<[1], [0], [0], [1], [0, 0, 1, 1], [], []>} : vector<1x32xf32>, vector<32x128xf32>, vector<1x128xf32> -> vector<1x128xf32>
    %338 = arith.addf %336, %337 : vector<1x128xf32>
    %339 = arith.negf %338 : vector<1x128xf32>
    %340 = math.exp %339 : vector<1x128xf32>
    %cst_100 = arith.constant 1.000000e+00 : f32
    %341 = vector.broadcast %cst_100 : f32 to vector<1x128xf32>
    %342 = arith.addf %341, %340 : vector<1x128xf32>
    %343 = arith.divf %341, %342 : vector<1x128xf32>
    %344 = vector.extract_strided_slice %343 {offsets = [0, 0], sizes = [1, 32], strides = [1, 1]} : vector<1x128xf32> to vector<1x32xf32>
    %345 = vector.extract_strided_slice %343 {offsets = [0, 32], sizes = [1, 32], strides = [1, 1]} : vector<1x128xf32> to vector<1x32xf32>
    %346 = vector.extract_strided_slice %343 {offsets = [0, 96], sizes = [1, 32], strides = [1, 1]} : vector<1x128xf32> to vector<1x32xf32>
    %347 = vector.extract_strided_slice %338 {offsets = [0, 64], sizes = [1, 32], strides = [1, 1]} : vector<1x128xf32> to vector<1x32xf32>
    %348 = math.tanh %347 : vector<1x32xf32>
    %349 = arith.mulf %345, %329 : vector<1x32xf32>
    %350 = arith.mulf %344, %348 : vector<1x32xf32>
    %351 = arith.addf %349, %350 : vector<1x32xf32>
    %352 = math.tanh %351 : vector<1x32xf32>
    %353 = arith.mulf %346, %352 : vector<1x32xf32>
    %cst_101 = arith.constant dense<0.000000e+00> : vector<1x128xf32>
    %354 = tpu.matmul %353, %13, %cst_101 {dimension_numbers = #tpu.dot_dimension_numbers<[1], [0], [0], [1], [0, 0, 1, 1], [], []>} : vector<1x32xf32>, vector<32x128xf32>, vector<1x128xf32> -> vector<1x128xf32>
    %355 = arith.addf %354, %14 : vector<1x128xf32>
    %c7 = arith.constant 7 : index
    %c0_102 = arith.constant 0 : index
    %356 = vector.load %arg10[%c7, %c0_102] : memref<8x128xf32, #tpu.memory_space<vmem>>, vector<1x128xf32>
    tpu.vector_store %arg10[%c7, %c0_102], %355 {strides = array<i32>} : memref<8x128xf32, #tpu.memory_space<vmem>>, vector<1x128xf32>,
    %c1_103 = arith.constant 1 : index
    %c0_104 = arith.constant 0 : index
    %c0_105 = arith.constant 0 : index
    %357 = vector.load %arg11[%c1_103, %c0_104, %c0_105] : memref<2x1x32xf32, #tpu.memory_space<vmem>>, vector<1x1x32xf32>
    %358 = vector.shape_cast %357 : vector<1x1x32xf32> to vector<1x32xf32>
    %359 = vector.shape_cast %353 : vector<1x32xf32> to vector<1x1x32xf32>
    tpu.vector_store %arg11[%c1_103, %c0_104, %c0_105], %359 {strides = array<i32>} : memref<2x1x32xf32, #tpu.memory_space<vmem>>, vector<1x1x32xf32>,
    %c1_106 = arith.constant 1 : index
    %c0_107 = arith.constant 0 : index
    %c0_108 = arith.constant 0 : index
    %360 = vector.load %arg12[%c1_106, %c0_107, %c0_108] : memref<2x1x32xf32, #tpu.memory_space<vmem>>, vector<1x1x32xf32>
    %361 = vector.shape_cast %360 : vector<1x1x32xf32> to vector<1x32xf32>
    %362 = vector.shape_cast %351 : vector<1x32xf32> to vector<1x1x32xf32>
    tpu.vector_store %arg12[%c1_106, %c0_107, %c0_108], %362 {strides = array<i32>} : memref<2x1x32xf32, #tpu.memory_space<vmem>>, vector<1x1x32xf32>,
    return
  }
}

</mosaic_0001>

<llo_original>
// kernel: lstm_model_forward.1
$region0: #{lstm_model_forward.1}
  #allocation0 [shape = 'u32[]', space=smem, size = 0x4, offset = 0x4, fixed_abs, tag = 'smem constant byte address 0x4 - core index']
  #allocation1 [shape = 'u32[72,128]{1,0:T(1,128)}', space=vmem, size = 0x9000, scoped, tag = 'internal scratch']
  %s0 = inlined_call_operand.vmem [shape: f32[8,16], index: 0, kind: input, shape index: {}]
  %s1 = inlined_call_operand.vmem [shape: f32[16,32], index: 1, kind: input, shape index: {}]
  %s2 = inlined_call_operand.vmem [shape: f32[1,32], index: 2, kind: input, shape index: {}]
  %s3 = inlined_call_operand.vmem [shape: f32[2,32,128], index: 3, kind: input, shape index: {}]
  %s4 = inlined_call_operand.hbm [shape: f32[2,32,128], index: 4, kind: input, shape index: {}]
  %s5 = inlined_call_operand.vmem [shape: f32[2,1,128], index: 5, kind: input, shape index: {}]
  %s6 = inlined_call_operand.vmem [shape: f32[32,128], index: 6, kind: input, shape index: {}]
  %s7 = inlined_call_operand.vmem [shape: f32[1,128], index: 7, kind: input, shape index: {}]
  %s8 = inlined_call_operand.vmem [shape: f32[2,1,32], index: 8, kind: input, shape index: {}]
  %s9 = inlined_call_operand.vmem [shape: f32[2,1,32], index: 9, kind: input, shape index: {}]
  %s10 = inlined_call_operand.hbm [shape: f32[8,128], index: 10, kind: output, shape index: {0}]
  %s11 = inlined_call_operand.hbm [shape: f32[2,1,32], index: 11, kind: output, shape index: {1}]
  %s12 = inlined_call_operand.hbm [shape: f32[2,1,32], index: 12, kind: output, shape index: {2}]
  %13 = xla_tuple %s10, %s11, %s12
  %s14 = sld [smem:[#allocation0]]
  $region70: #{lstm_model_forward.1} parent=0
    _
  %s16 = ssub.s32 1, %s14
  %s17 = scalar_select 0, %s16, %s14
  $region1: #{lstm_model_forward.1} parent=0
    #allocation2 [shape = 'u8[32768]{0}', space=vmem, size = 0x8000, scoped, tag = 'input window, operand 4, single buffered']
    #allocation3 [shape = 's32[1]{0}', space=sflag, size = 0x4, scoped, tag = 'scoped memory for lstm_model_forward.1']
    #allocation4 [shape = 's32[1]{0}', space=sflag, size = 0x4, scoped, tag = 'scoped memory for lstm_model_forward.1']
    #allocation5 [shape = 'u8[4096]{0}', space=vmem, size = 0x1000, scoped, tag = 'output window, operand 0, single buffered']
    #allocation6 [shape = 'u8[1024]{0}', space=vmem, size = 0x400, scoped, tag = 'output window, operand 1, single buffered']
    #allocation7 [shape = 's32[1]{0}', space=sflag, size = 0x4, scoped, tag = 'scoped memory for lstm_model_forward.1']
    #allocation8 [shape = 'u8[1024]{0}', space=vmem, size = 0x400, scoped, tag = 'output window, operand 2, single buffered']
    %18 = vsyncpa [#allocation3], 0
    %19 = vsyncpa [#allocation4], 0
    %20 = vsyncpa [#allocation7], 0
    // Predicated region
    $region2: #{lstm_model_forward.1} parent=1 // pred_check
      _
    $region3: #{lstm_model_forward.1} parent=1 // pred_check_branch
      %22 = sbr.rel (0) target = $region5
    $region4: #{lstm_model_forward.1} parent=1 // pred_region
      _
    $region5: #{lstm_model_forward.1} parent=1 // pred_fallthru
      _
    // Predicated region
    $region6: #{lstm_model_forward.1} parent=1 // pred_check
      _
    $region7: #{lstm_model_forward.1} parent=1 // pred_check_branch
      %24 = sbr.rel (0) target = $region9
    $region8: #{lstm_model_forward.1} parent=1 // pred_region
      _
    $region9: #{lstm_model_forward.1} parent=1 // pred_fallthru
      _
    // Predicated region
    $region10: #{lstm_model_forward.1} parent=1 // pred_check
      _
    $region11: #{lstm_model_forward.1} parent=1 // pred_check_branch
      %26 = sbr.rel (0) target = $region13
    $region12: #{lstm_model_forward.1} parent=1 // pred_region
      _
    $region13: #{lstm_model_forward.1} parent=1 // pred_fallthru
      _
    // Predicated region
    $region14: #{lstm_model_forward.1} parent=1 // pred_check
      _
    $region15: #{lstm_model_forward.1} parent=1 // pred_check_branch
      %28 = sbr.rel (0) target = $region17
    $region16: #{lstm_model_forward.1} parent=1 // pred_region
      _
    $region17: #{lstm_model_forward.1} parent=1 // pred_fallthru
      _
    // Predicated region
    $region18: #{lstm_model_forward.1} parent=1 // pred_check
      _
    $region19: #{lstm_model_forward.1} parent=1 // pred_check_branch
      %30 = sbr.rel (0) target = $region21
    $region20: #{lstm_model_forward.1} parent=1 // pred_region
      %32 = vsyncadd [#allocation3], 0
      %s33 = sshll.u32 %s4, 4
      %s34 = int_to_ptr.hbm [resolvable:$true] %s33
      %s35 = sshll.u32 [#allocation2], 4
      %s36 = int_to_ptr.vmem [resolvable:$true] %s35
      %41 = dma.hbm_to_vmem [thread:$0]  %s34, 1024, %s36, [#allocation3], 128, 128, 8
    $region21: #{lstm_model_forward.1} parent=1 // pred_fallthru
      _
    // Predicated region
    $region22: #{lstm_model_forward.1} parent=1 // pred_check
      _
    $region23: #{lstm_model_forward.1} parent=1 // pred_check_branch
      %43 = sbr.rel (0) target = $region25
    $region24: #{lstm_model_forward.1} parent=1 // pred_region
      _
    $region25: #{lstm_model_forward.1} parent=1 // pred_fallthru
      _
    // Predicated region
    $region26: #{lstm_model_forward.1} parent=1 // pred_check
      _
    $region27: #{lstm_model_forward.1} parent=1 // pred_check_branch
      %45 = sbr.rel (0) target = $region29
    $region28: #{lstm_model_forward.1} parent=1 // pred_region
      _
    $region29: #{lstm_model_forward.1} parent=1 // pred_fallthru
      _
    // Predicated region
    $region30: #{lstm_model_forward.1} parent=1 // pred_check
      _
    $region31: #{lstm_model_forward.1} parent=1 // pred_check_branch
      %47 = sbr.rel (0) target = $region33
    $region32: #{lstm_model_forward.1} parent=1 // pred_region
      _
    $region33: #{lstm_model_forward.1} parent=1 // pred_fallthru
      _
    // Predicated region
    $region34: #{lstm_model_forward.1} parent=1 // pred_check
      _
    $region35: #{lstm_model_forward.1} parent=1 // pred_check_branch
      %49 = sbr.rel (0) target = $region37
    $region36: #{lstm_model_forward.1} parent=1 // pred_region
      _
    $region37: #{lstm_model_forward.1} parent=1 // pred_fallthru
      _
    // Predicated region
    $region38: #{lstm_model_forward.1} parent=1 // pred_check
      _
    $region39: #{lstm_model_forward.1} parent=1 // pred_check_branch
      %51 = sbr.rel (0) target = $region41
    $region40: #{lstm_model_forward.1} parent=1 // pred_region
      _
    $region41: #{lstm_model_forward.1} parent=1 // pred_fallthru
      _
    // Predicated region
    $region42: #{lstm_model_forward.1} parent=1 // pred_check
      _
    $region43: #{lstm_model_forward.1} parent=1 // pred_check_branch
      %53 = sbr.rel (0) target = $region45
    $region44: #{lstm_model_forward.1} parent=1 // pred_region
      %55 = dma.done [#allocation3], 1024
    $region45: #{lstm_model_forward.1} parent=1 // pred_fallthru
      _
    %v56 = vld [vmem:[%s0] sm:$0xff]
    %v57 = vld [vmem:[%s1] sm:$0xff]
    %v58 = vld [vmem:[%s1 + $0x8] sm:$0xff]
    %v59 = vld [vmem:[%s2] sm:$0x1]
    %v61 = vperm.slane %v59, 0
    %vm63 = vcmask 130048
    %v65 = vsel %vm63, %v56, 0
    %67 = vmatpush.msra.mxu0 0.0
    %68 = vmatpush.msra.mxu0 0.0
    %69 = vmatpush.msra.mxu0 0.0
    %70 = vmatpush.msra.mxu0 0.0
    %71 = vmatpush.msra.mxu0 0.0
    %72 = vmatpush.msra.mxu0 0.0
    %73 = vmatpush.msra.mxu0 0.0
    %74 = vmatpush.msra.mxu0 0.0
    %75 = vmatpush.msra.mxu0 0.0
    %76 = vmatpush.msra.mxu0 0.0
    %77 = vmatpush.msra.mxu0 0.0
    %78 = vmatpush.msra.mxu0 0.0
    %79 = vmatpush.msra.mxu0 0.0
    %80 = vmatpush.msra.mxu0 0.0
    %81 = vmatpush.msra.mxu0 %v58
    %82 = vmatpush.msra.mxu0 %v57
    %83 = vmatmul.f32.gmra.mxu0 %v65
    %v84 = vpop.f32.mrf.mxu0
    %v85 = vadd.f32 %v61, %v84
    %86 = vdwg.mxu0
    %v87 = vld [vmem:[%s3] sm:$0xff]
    %v88 = vld [vmem:[%s3 + $0x8] sm:$0xff]
    %v89 = vld [vmem:[%s3 + $0x10] sm:$0xff]
    %v90 = vld [vmem:[%s3 + $0x18] sm:$0xff]
    %v91 = vld [vmem:[%s5] sm:$0x1]
    %v93 = vperm.slane %v91, 0
    %vm95 = vcmask 261120
    %v97 = vsel %vm95, %v85, 0
    %99 = vmatpush.msra.mxu0 0.0
    %100 = vmatpush.msra.mxu0 0.0
    %101 = vmatpush.msra.mxu0 0.0
    %102 = vmatpush.msra.mxu0 0.0
    %103 = vmatpush.msra.mxu0 0.0
    %104 = vmatpush.msra.mxu0 0.0
    %105 = vmatpush.msra.mxu0 0.0
    %106 = vmatpush.msra.mxu0 0.0
    %107 = vmatpush.msra.mxu0 0.0
    %108 = vmatpush.msra.mxu0 0.0
    %109 = vmatpush.msra.mxu0 0.0
    %110 = vmatpush.msra.mxu0 0.0
    %111 = vmatpush.msra.mxu0 %v90
    %112 = vmatpush.msra.mxu0 %v89
    %113 = vmatpush.msra.mxu0 %v88
    %114 = vmatpush.msra.mxu0 %v87
    %115 = vmatmul.f32.gmra.mxu0 %v97
    %v116 = vpop.f32.mrf.mxu0
    %v117 = vadd.f32 %v93, %v116
    %118 = vdwg.mxu0
    %v119 = vld [vmem:[%s6] sm:$0xff]
    %v120 = vld [vmem:[%s6 + $0x8] sm:$0xff]
    %v121 = vld [vmem:[%s6 + $0x10] sm:$0xff]
    %v122 = vld [vmem:[%s6 + $0x18] sm:$0xff]
    %v123 = vld [vmem:[%s7] sm:$0x1]
    %v124 = vld [vmem:[#allocation2] sm:$0xff]
    %v125 = vld [vmem:[#allocation2 + $0x8] sm:$0xff]
    %v126 = vld [vmem:[#allocation2 + $0x10] sm:$0xff]
    %v127 = vld [vmem:[#allocation2 + $0x18] sm:$0xff]
    %v128 = vld [vmem:[%s8] sm:$0x1]
    %v129 = vld [vmem:[%s9] sm:$0x1]
    %v131 = vsel %vm95, %v128, 0
    %133 = vmatpush.msra.mxu0 0.0
    %134 = vmatpush.msra.mxu0 0.0
    %135 = vmatpush.msra.mxu0 0.0
    %136 = vmatpush.msra.mxu0 0.0
    %137 = vmatpush.msra.mxu0 0.0
    %138 = vmatpush.msra.mxu0 0.0
    %139 = vmatpush.msra.mxu0 0.0
    %140 = vmatpush.msra.mxu0 0.0
    %141 = vmatpush.msra.mxu0 0.0
    %142 = vmatpush.msra.mxu0 0.0
    %143 = vmatpush.msra.mxu0 0.0
    %144 = vmatpush.msra.mxu0 0.0
    %145 = vmatpush.msra.mxu0 %v127
    %146 = vmatpush.msra.mxu0 %v126
    %147 = vmatpush.msra.mxu0 %v125
    %148 = vmatpush.msra.mxu0 %v124
    %149 = vmatmul.f32.gmra.mxu0 %v131
    %v150 = vpop.f32.mrf.mxu0
    %v151 = vadd.f32 0.0, %v150
    %152 = vdwg.mxu0
    %v153 = vadd.f32 %v117, %v151
    %v154 = vxor.u32 %v153, 2147483648
    %v155 = vmul.f32 %v154, 1.442695
    %v156 = vpow.pop %v155
    %v157 = vadd.f32 %v156, 1.0
    %v158 = vrcp.pop %v157
    %v159 = vmul.f32 %v157, %v158
    %v160 = vsub.f32 1.0, %v159
    %v161 = vmul.f32 %v158, %v160
    %v162 = vadd.f32 %v158, %v161
    %vm163 = vweird.f32 %v157
    %vm164 = vweird.f32 %v158
    %vm165 = vmor %vm163, %vm164
    %v166 = vsel %vm165, %v158, %v162
    %v167 = vand.u32 2147483647, %v157
    %vm168 = vcmp.eq.f32.partialorder %v167, 8.507059e+37
    %v169 = vand.u32 %v157, 2147483648
    %v170 = vor.u32 1.1754944e-38, %v169
    %v171 = vsel %vm168, %v170, %v166
    %v172 = vmul.f32 1.0, %v171
    %v173 = vtanh.pop %v153
    %v175 = vperm.slane %v129, 0
    %176 = vrot.lane.b32.xlu0 %v175, 32
    %v177 = vpop.permute.xlu0 %176
    %v179 = vmul.f32 %v172, %v177
    %181 = vrot.lane.b32.xlu0 %v173, 64
    %v182 = vpop.permute.xlu0 %181
    %v184 = vmul.f32 %v172, %v182
    %186 = vrot.lane.b32.xlu0 %v184, 32
    %v187 = vpop.permute.xlu0 %186
    %v189 = vadd.f32 %v179, %v187
    %v190 = vtanh.pop %v189
    %192 = vrot.lane.b32.xlu0 %v190, 64
    %v193 = vpop.permute.xlu0 %192
    %v195 = vmul.f32 %v172, %v193
    %197 = vrot.lane.b32.xlu0 %v195, 32
    %v198 = vpop.permute.xlu0 %197
    %v199 = vsel %vm95, %v198, 0
    %201 = vmatpush.msra.mxu0 0.0
    %202 = vmatpush.msra.mxu0 0.0
    %203 = vmatpush.msra.mxu0 0.0
    %204 = vmatpush.msra.mxu0 0.0
    %205 = vmatpush.msra.mxu0 0.0
    %206 = vmatpush.msra.mxu0 0.0
    %207 = vmatpush.msra.mxu0 0.0
    %208 = vmatpush.msra.mxu0 0.0
    %209 = vmatpush.msra.mxu0 0.0
    %210 = vmatpush.msra.mxu0 0.0
    %211 = vmatpush.msra.mxu0 0.0
    %212 = vmatpush.msra.mxu0 0.0
    %213 = vmatpush.msra.mxu0 %v127
    %214 = vmatpush.msra.mxu0 %v126
    %215 = vmatpush.msra.mxu0 %v125
    %216 = vmatpush.msra.mxu0 %v124
    %217 = vmatmul.f32.gmra.mxu0 %v199
    %v218 = vpop.f32.mrf.mxu0
    %v219 = vadd.f32 0.0, %v218
    %220 = vdwg.mxu0
    %v222 = vrot.slane %v219, 7
    %v224 = vadd.f32 %v117, %v222
    %v225 = vxor.u32 %v224, 2147483648
    %v226 = vmul.f32 %v225, 1.442695
    %v227 = vpow.pop %v226
    %v228 = vadd.f32 %v227, 1.0
    %v229 = vrcp.pop %v228
    %v230 = vmul.f32 %v228, %v229
    %v231 = vsub.f32 1.0, %v230
    %v232 = vmul.f32 %v229, %v231
    %v233 = vadd.f32 %v229, %v232
    %vm234 = vweird.f32 %v228
    %vm235 = vweird.f32 %v229
    %vm236 = vmor %vm234, %vm235
    %v237 = vsel %vm236, %v229, %v233
    %v238 = vand.u32 2147483647, %v228
    %vm239 = vcmp.eq.f32.partialorder %v238, 8.507059e+37
    %v240 = vand.u32 %v228, 2147483648
    %v241 = vor.u32 1.1754944e-38, %v240
    %v242 = vsel %vm239, %v241, %v237
    %v243 = vmul.f32 1.0, %v242
    %v244 = vtanh.pop %v224
    %v246 = vrot.slane %v189, 7
    %v248 = vmul.f32 %v243, %v246
    %250 = vrot.lane.b32.xlu0 %v244, 64
    %v251 = vpop.permute.xlu0 %250
    %v253 = vmul.f32 %v243, %v251
    %255 = vrot.lane.b32.xlu0 %v253, 32
    %v256 = vpop.permute.xlu0 %255
    %v258 = vadd.f32 %v248, %v256
    %v259 = vtanh.pop %v258
    %261 = vrot.lane.b32.xlu0 %v259, 64
    %v262 = vpop.permute.xlu0 %261
    %v264 = vmul.f32 %v243, %v262
    %v266 = vrot.slane %v264, 1
    %267 = vrot.lane.b32.xlu0 %v266, 32
    %v268 = vpop.permute.xlu0 %267
    %v269 = vsel %vm95, %v268, 0
    %271 = vmatpush.msra.mxu0 0.0
    %272 = vmatpush.msra.mxu0 0.0
    %273 = vmatpush.msra.mxu0 0.0
    %274 = vmatpush.msra.mxu0 0.0
    %275 = vmatpush.msra.mxu0 0.0
    %276 = vmatpush.msra.mxu0 0.0
    %277 = vmatpush.msra.mxu0 0.0
    %278 = vmatpush.msra.mxu0 0.0
    %279 = vmatpush.msra.mxu0 0.0
    %280 = vmatpush.msra.mxu0 0.0
    %281 = vmatpush.msra.mxu0 0.0
    %282 = vmatpush.msra.mxu0 0.0
    %283 = vmatpush.msra.mxu0 %v127
    %284 = vmatpush.msra.mxu0 %v126
    %285 = vmatpush.msra.mxu0 %v125
    %286 = vmatpush.msra.mxu0 %v124
    %287 = vmatmul.f32.gmra.mxu0 %v269
    %v288 = vpop.f32.mrf.mxu0
    %v289 = vadd.f32 0.0, %v288
    %290 = vdwg.mxu0
    %v292 = vrot.slane %v289, 6
    %v294 = vadd.f32 %v117, %v292
    %v295 = vxor.u32 %v294, 2147483648
    %v296 = vmul.f32 %v295, 1.442695
    %v297 = vpow.pop %v296
    %v298 = vadd.f32 %v297, 1.0
    %v299 = vrcp.pop %v298
    %v300 = vmul.f32 %v298, %v299
    %v301 = vsub.f32 1.0, %v300
    %v302 = vmul.f32 %v299, %v301
    %v303 = vadd.f32 %v299, %v302
    %vm304 = vweird.f32 %v298
    %vm305 = vweird.f32 %v299
    %vm306 = vmor %vm304, %vm305
    %v307 = vsel %vm306, %v299, %v303
    %v308 = vand.u32 2147483647, %v298
    %vm309 = vcmp.eq.f32.partialorder %v308, 8.507059e+37
    %v310 = vand.u32 %v298, 2147483648
    %v311 = vor.u32 1.1754944e-38, %v310
    %v312 = vsel %vm309, %v311, %v307
    %v313 = vmul.f32 1.0, %v312
    %v314 = vtanh.pop %v294
    %v316 = vrot.slane %v258, 7
    %v318 = vmul.f32 %v313, %v316
    %320 = vrot.lane.b32.xlu0 %v314, 64
    %v321 = vpop.permute.xlu0 %320
    %v323 = vmul.f32 %v313, %v321
    %325 = vrot.lane.b32.xlu0 %v323, 32
    %v326 = vpop.permute.xlu0 %325
    %v328 = vadd.f32 %v318, %v326
    %v329 = vtanh.pop %v328
    %331 = vrot.lane.b32.xlu0 %v329, 64
    %v332 = vpop.permute.xlu0 %331
    %v334 = vmul.f32 %v313, %v332
    %v336 = vrot.slane %v334, 2
    %337 = vrot.lane.b32.xlu0 %v336, 32
    %v338 = vpop.permute.xlu0 %337
    %v339 = vsel %vm95, %v338, 0
    %341 = vmatpush.msra.mxu0 0.0
    %342 = vmatpush.msra.mxu0 0.0
    %343 = vmatpush.msra.mxu0 0.0
    %344 = vmatpush.msra.mxu0 0.0
    %345 = vmatpush.msra.mxu0 0.0
    %346 = vmatpush.msra.mxu0 0.0
    %347 = vmatpush.msra.mxu0 0.0
    %348 = vmatpush.msra.mxu0 0.0
    %349 = vmatpush.msra.mxu0 0.0
    %350 = vmatpush.msra.mxu0 0.0
    %351 = vmatpush.msra.mxu0 0.0
    %352 = vmatpush.msra.mxu0 0.0
    %353 = vmatpush.msra.mxu0 %v127
    %354 = vmatpush.msra.mxu0 %v126
    %355 = vmatpush.msra.mxu0 %v125
    %356 = vmatpush.msra.mxu0 %v124
    %357 = vmatmul.f32.gmra.mxu0 %v339
    %v358 = vpop.f32.mrf.mxu0
    %v359 = vadd.f32 0.0, %v358
    %360 = vdwg.mxu0
    %v362 = vrot.slane %v359, 5
    %v364 = vadd.f32 %v117, %v362
    %v365 = vxor.u32 %v364, 2147483648
    %v366 = vmul.f32 %v365, 1.442695
    %v367 = vpow.pop %v366
    %v368 = vadd.f32 %v367, 1.0
    %v369 = vrcp.pop %v368
    %v370 = vmul.f32 %v368, %v369
    %v371 = vsub.f32 1.0, %v370
    %v372 = vmul.f32 %v369, %v371
    %v373 = vadd.f32 %v369, %v372
    %vm374 = vweird.f32 %v368
    %vm375 = vweird.f32 %v369
    %vm376 = vmor %vm374, %vm375
    %v377 = vsel %vm376, %v369, %v373
    %v378 = vand.u32 2147483647, %v368
    %vm379 = vcmp.eq.f32.partialorder %v378, 8.507059e+37
    %v380 = vand.u32 %v368, 2147483648
    %v381 = vor.u32 1.1754944e-38, %v380
    %v382 = vsel %vm379, %v381, %v377
    %v383 = vmul.f32 1.0, %v382
    %v384 = vtanh.pop %v364
    %v386 = vrot.slane %v328, 7
    %v388 = vmul.f32 %v383, %v386
    %390 = vrot.lane.b32.xlu0 %v384, 64
    %v391 = vpop.permute.xlu0 %390
    %v393 = vmul.f32 %v383, %v391
    %395 = vrot.lane.b32.xlu0 %v393, 32
    %v396 = vpop.permute.xlu0 %395
    %v398 = vadd.f32 %v388, %v396
    %v399 = vtanh.pop %v398
    %401 = vrot.lane.b32.xlu0 %v399, 64
    %v402 = vpop.permute.xlu0 %401
    %v404 = vmul.f32 %v383, %v402
    %v406 = vrot.slane %v404, 3
    %407 = vrot.lane.b32.xlu0 %v406, 32
    %v408 = vpop.permute.xlu0 %407
    %v409 = vsel %vm95, %v408, 0
    %411 = vmatpush.msra.mxu0 0.0
    %412 = vmatpush.msra.mxu0 0.0
    %413 = vmatpush.msra.mxu0 0.0
    %414 = vmatpush.msra.mxu0 0.0
    %415 = vmatpush.msra.mxu0 0.0
    %416 = vmatpush.msra.mxu0 0.0
    %417 = vmatpush.msra.mxu0 0.0
    %418 = vmatpush.msra.mxu0 0.0
    %419 = vmatpush.msra.mxu0 0.0
    %420 = vmatpush.msra.mxu0 0.0
    %421 = vmatpush.msra.mxu0 0.0
    %422 = vmatpush.msra.mxu0 0.0
    %423 = vmatpush.msra.mxu0 %v127
    %424 = vmatpush.msra.mxu0 %v126
    %425 = vmatpush.msra.mxu0 %v125
    %426 = vmatpush.msra.mxu0 %v124
    %427 = vmatmul.f32.gmra.mxu0 %v409
    %v428 = vpop.f32.mrf.mxu0
    %v429 = vadd.f32 0.0, %v428
    %430 = vdwg.mxu0
    %v432 = vrot.slane %v429, 4
    %v434 = vadd.f32 %v117, %v432
    %v435 = vxor.u32 %v434, 2147483648
    %v436 = vmul.f32 %v435, 1.442695
    %v437 = vpow.pop %v436
    %v438 = vadd.f32 %v437, 1.0
    %v439 = vrcp.pop %v438
    %v440 = vmul.f32 %v438, %v439
    %v441 = vsub.f32 1.0, %v440
    %v442 = vmul.f32 %v439, %v441
    %v443 = vadd.f32 %v439, %v442
    %vm444 = vweird.f32 %v438
    %vm445 = vweird.f32 %v439
    %vm446 = vmor %vm444, %vm445
    %v447 = vsel %vm446, %v439, %v443
    %v448 = vand.u32 2147483647, %v438
    %vm449 = vcmp.eq.f32.partialorder %v448, 8.507059e+37
    %v450 = vand.u32 %v438, 2147483648
    %v451 = vor.u32 1.1754944e-38, %v450
    %v452 = vsel %vm449, %v451, %v447
    %v453 = vmul.f32 1.0, %v452
    %v454 = vtanh.pop %v434
    %v456 = vrot.slane %v398, 7
    %v458 = vmul.f32 %v453, %v456
    %460 = vrot.lane.b32.xlu0 %v454, 64
    %v461 = vpop.permute.xlu0 %460
    %v463 = vmul.f32 %v453, %v461
    %465 = vrot.lane.b32.xlu0 %v463, 32
    %v466 = vpop.permute.xlu0 %465
    %v468 = vadd.f32 %v458, %v466
    %v469 = vtanh.pop %v468
    %471 = vrot.lane.b32.xlu0 %v469, 64
    %v472 = vpop.permute.xlu0 %471
    %v474 = vmul.f32 %v453, %v472
    %v476 = vrot.slane %v474, 4
    %477 = vrot.lane.b32.xlu0 %v476, 32
    %v478 = vpop.permute.xlu0 %477
    %v479 = vsel %vm95, %v478, 0
    %481 = vmatpush.msra.mxu0 0.0
    %482 = vmatpush.msra.mxu0 0.0
    %483 = vmatpush.msra.mxu0 0.0
    %484 = vmatpush.msra.mxu0 0.0
    %485 = vmatpush.msra.mxu0 0.0
    %486 = vmatpush.msra.mxu0 0.0
    %487 = vmatpush.msra.mxu0 0.0
    %488 = vmatpush.msra.mxu0 0.0
    %489 = vmatpush.msra.mxu0 0.0
    %490 = vmatpush.msra.mxu0 0.0
    %491 = vmatpush.msra.mxu0 0.0
    %492 = vmatpush.msra.mxu0 0.0
    %493 = vmatpush.msra.mxu0 %v127
    %494 = vmatpush.msra.mxu0 %v126
    %495 = vmatpush.msra.mxu0 %v125
    %496 = vmatpush.msra.mxu0 %v124
    %497 = vmatmul.f32.gmra.mxu0 %v479
    %v498 = vpop.f32.mrf.mxu0
    %v499 = vadd.f32 0.0, %v498
    %500 = vdwg.mxu0
    %v502 = vrot.slane %v499, 3
    %v504 = vadd.f32 %v117, %v502
    %v505 = vxor.u32 %v504, 2147483648
    %v506 = vmul.f32 %v505, 1.442695
    %v507 = vpow.pop %v506
    %v508 = vadd.f32 %v507, 1.0
    %v509 = vrcp.pop %v508
    %v510 = vmul.f32 %v508, %v509
    %v511 = vsub.f32 1.0, %v510
    %v512 = vmul.f32 %v509, %v511
    %v513 = vadd.f32 %v509, %v512
    %vm514 = vweird.f32 %v508
    %vm515 = vweird.f32 %v509
    %vm516 = vmor %vm514, %vm515
    %v517 = vsel %vm516, %v509, %v513
    %v518 = vand.u32 2147483647, %v508
    %vm519 = vcmp.eq.f32.partialorder %v518, 8.507059e+37
    %v520 = vand.u32 %v508, 2147483648
    %v521 = vor.u32 1.1754944e-38, %v520
    %v522 = vsel %vm519, %v521, %v517
    %v523 = vmul.f32 1.0, %v522
    %v524 = vtanh.pop %v504
    %v526 = vrot.slane %v468, 7
    %v528 = vmul.f32 %v523, %v526
    %530 = vrot.lane.b32.xlu0 %v524, 64
    %v531 = vpop.permute.xlu0 %530
    %v533 = vmul.f32 %v523, %v531
    %535 = vrot.lane.b32.xlu0 %v533, 32
    %v536 = vpop.permute.xlu0 %535
    %v538 = vadd.f32 %v528, %v536
    %v539 = vtanh.pop %v538
    %541 = vrot.lane.b32.xlu0 %v539, 64
    %v542 = vpop.permute.xlu0 %541
    %v544 = vmul.f32 %v523, %v542
    %v546 = vrot.slane %v544, 5
    %547 = vrot.lane.b32.xlu0 %v546, 32
    %v548 = vpop.permute.xlu0 %547
    %v549 = vsel %vm95, %v548, 0
    %551 = vmatpush.msra.mxu0 0.0
    %552 = vmatpush.msra.mxu0 0.0
    %553 = vmatpush.msra.mxu0 0.0
    %554 = vmatpush.msra.mxu0 0.0
    %555 = vmatpush.msra.mxu0 0.0
    %556 = vmatpush.msra.mxu0 0.0
    %557 = vmatpush.msra.mxu0 0.0
    %558 = vmatpush.msra.mxu0 0.0
    %559 = vmatpush.msra.mxu0 0.0
    %560 = vmatpush.msra.mxu0 0.0
    %561 = vmatpush.msra.mxu0 0.0
    %562 = vmatpush.msra.mxu0 0.0
    %563 = vmatpush.msra.mxu0 %v127
    %564 = vmatpush.msra.mxu0 %v126
    %565 = vmatpush.msra.mxu0 %v125
    %566 = vmatpush.msra.mxu0 %v124
    %567 = vmatmul.f32.gmra.mxu0 %v549
    %v568 = vpop.f32.mrf.mxu0
    %v569 = vadd.f32 0.0, %v568
    %570 = vdwg.mxu0
    %v572 = vrot.slane %v569, 2
    %v574 = vadd.f32 %v117, %v572
    %v575 = vxor.u32 %v574, 2147483648
    %v576 = vmul.f32 %v575, 1.442695
    %v577 = vpow.pop %v576
    %v578 = vadd.f32 %v577, 1.0
    %v579 = vrcp.pop %v578
    %v580 = vmul.f32 %v578, %v579
    %v581 = vsub.f32 1.0, %v580
    %v582 = vmul.f32 %v579, %v581
    %v583 = vadd.f32 %v579, %v582
    %vm584 = vweird.f32 %v578
    %vm585 = vweird.f32 %v579
    %vm586 = vmor %vm584, %vm585
    %v587 = vsel %vm586, %v579, %v583
    %v588 = vand.u32 2147483647, %v578
    %vm589 = vcmp.eq.f32.partialorder %v588, 8.507059e+37
    %v590 = vand.u32 %v578, 2147483648
    %v591 = vor.u32 1.1754944e-38, %v590
    %v592 = vsel %vm589, %v591, %v587
    %v593 = vmul.f32 1.0, %v592
    %v594 = vtanh.pop %v574
    %v596 = vrot.slane %v538, 7
    %v598 = vmul.f32 %v593, %v596
    %600 = vrot.lane.b32.xlu0 %v594, 64
    %v601 = vpop.permute.xlu0 %600
    %v603 = vmul.f32 %v593, %v601
    %605 = vrot.lane.b32.xlu0 %v603, 32
    %v606 = vpop.permute.xlu0 %605
    %v608 = vadd.f32 %v598, %v606
    %v609 = vtanh.pop %v608
    %611 = vrot.lane.b32.xlu0 %v609, 64
    %v612 = vpop.permute.xlu0 %611
    %v614 = vmul.f32 %v593, %v612
    %v616 = vrot.slane %v614, 6
    %617 = vrot.lane.b32.xlu0 %v616, 32
    %v618 = vpop.permute.xlu0 %617
    %v619 = vsel %vm95, %v618, 0
    %621 = vmatpush.msra.mxu0 0.0
    %622 = vmatpush.msra.mxu0 0.0
    %623 = vmatpush.msra.mxu0 0.0
    %624 = vmatpush.msra.mxu0 0.0
    %625 = vmatpush.msra.mxu0 0.0
    %626 = vmatpush.msra.mxu0 0.0
    %627 = vmatpush.msra.mxu0 0.0
    %628 = vmatpush.msra.mxu0 0.0
    %629 = vmatpush.msra.mxu0 0.0
    %630 = vmatpush.msra.mxu0 0.0
    %631 = vmatpush.msra.mxu0 0.0
    %632 = vmatpush.msra.mxu0 0.0
    %633 = vmatpush.msra.mxu0 %v127
    %634 = vmatpush.msra.mxu0 %v126
    %635 = vmatpush.msra.mxu0 %v125
    %636 = vmatpush.msra.mxu0 %v124
    %637 = vmatmul.f32.gmra.mxu0 %v619
    %v638 = vpop.f32.mrf.mxu0
    %v639 = vadd.f32 0.0, %v638
    %640 = vdwg.mxu0
    %v642 = vrot.slane %v639, 1
    %v644 = vadd.f32 %v117, %v642
    %v645 = vxor.u32 %v644, 2147483648
    %v646 = vmul.f32 %v645, 1.442695
    %v647 = vpow.pop %v646
    %v648 = vadd.f32 %v647, 1.0
    %v649 = vrcp.pop %v648
    %v650 = vmul.f32 %v648, %v649
    %v651 = vsub.f32 1.0, %v650
    %v652 = vmul.f32 %v649, %v651
    %v653 = vadd.f32 %v649, %v652
    %vm654 = vweird.f32 %v648
    %vm655 = vweird.f32 %v649
    %vm656 = vmor %vm654, %vm655
    %v657 = vsel %vm656, %v649, %v653
    %v658 = vand.u32 2147483647, %v648
    %vm659 = vcmp.eq.f32.partialorder %v658, 8.507059e+37
    %v660 = vand.u32 %v648, 2147483648
    %v661 = vor.u32 1.1754944e-38, %v660
    %v662 = vsel %vm659, %v661, %v657
    %v663 = vmul.f32 1.0, %v662
    %v664 = vtanh.pop %v644
    %v666 = vrot.slane %v608, 7
    %v668 = vmul.f32 %v663, %v666
    %670 = vrot.lane.b32.xlu0 %v664, 64
    %v671 = vpop.permute.xlu0 %670
    %v673 = vmul.f32 %v663, %v671
    %675 = vrot.lane.b32.xlu0 %v673, 32
    %v676 = vpop.permute.xlu0 %675
    %v678 = vadd.f32 %v668, %v676
    %v679 = vtanh.pop %v678
    %681 = vrot.lane.b32.xlu0 %v679, 64
    %v682 = vpop.permute.xlu0 %681
    %v684 = vmul.f32 %v663, %v682
    %686 = vrot.lane.b32.xlu0 %v684, 32
    %v687 = vpop.permute.xlu0 %686
    %vm689 = vcmask 261127
    %690 = vst.msk [vmem:[#allocation6 - $0x7] sm:$0x80] %vm689, %v687
    %692 = vrot.lane.b32.xlu0 %v678, 96
    %v693 = vpop.permute.xlu0 %692
    %695 = vst.msk [vmem:[#allocation8 - $0x7] sm:$0x80] %vm689, %v693
    %s696 = scalar_lea.vmem [#allocation2], 32
    %v697 = vld [vmem:[%s696] sm:$0xff]
    %v698 = vld [vmem:[%s696 + $0x8] sm:$0xff]
    %v699 = vld [vmem:[%s696 + $0x10] sm:$0xff]
    %v700 = vld [vmem:[%s696 + $0x18] sm:$0xff]
    %s701 = scalar_lea.vmem %s3, 32
    %v702 = vld [vmem:[%s701] sm:$0xff]
    %v703 = vld [vmem:[%s701 + $0x8] sm:$0xff]
    %v704 = vld [vmem:[%s701 + $0x10] sm:$0xff]
    %v705 = vld [vmem:[%s701 + $0x18] sm:$0xff]
    %s706 = scalar_lea.vmem %s5, 1
    %v707 = vld [vmem:[%s706] sm:$0x1]
    %s708 = scalar_lea.vmem %s8, 1
    %v709 = vld [vmem:[%s708] sm:$0x1]
    %s710 = scalar_lea.vmem %s9, 1
    %v711 = vld [vmem:[%s710] sm:$0x1]
    %712 = vmatpush.msra.mxu0 0.0
    %713 = vmatpush.msra.mxu0 0.0
    %714 = vmatpush.msra.mxu0 0.0
    %715 = vmatpush.msra.mxu0 0.0
    %716 = vmatpush.msra.mxu0 0.0
    %717 = vmatpush.msra.mxu0 0.0
    %718 = vmatpush.msra.mxu0 0.0
    %719 = vmatpush.msra.mxu0 0.0
    %720 = vmatpush.msra.mxu0 0.0
    %721 = vmatpush.msra.mxu0 0.0
    %722 = vmatpush.msra.mxu0 0.0
    %723 = vmatpush.msra.mxu0 0.0
    %724 = vmatpush.msra.mxu0 %v705
    %725 = vmatpush.msra.mxu0 %v704
    %726 = vmatpush.msra.mxu0 %v703
    %727 = vmatpush.msra.mxu0 %v702
    %728 = vmatmul.f32.gmra.mxu0 %v199
    %v729 = vpop.f32.mrf.mxu0
    %v730 = vadd.f32 %v707, %v729
    %731 = vdwg.mxu0
    %v733 = vsel %vm95, %v709, 0
    %735 = vmatpush.msra.mxu0 0.0
    %736 = vmatpush.msra.mxu0 0.0
    %737 = vmatpush.msra.mxu0 0.0
    %738 = vmatpush.msra.mxu0 0.0
    %739 = vmatpush.msra.mxu0 0.0
    %740 = vmatpush.msra.mxu0 0.0
    %741 = vmatpush.msra.mxu0 0.0
    %742 = vmatpush.msra.mxu0 0.0
    %743 = vmatpush.msra.mxu0 0.0
    %744 = vmatpush.msra.mxu0 0.0
    %745 = vmatpush.msra.mxu0 0.0
    %746 = vmatpush.msra.mxu0 0.0
    %747 = vmatpush.msra.mxu0 %v700
    %748 = vmatpush.msra.mxu0 %v699
    %749 = vmatpush.msra.mxu0 %v698
    %750 = vmatpush.msra.mxu0 %v697
    %751 = vmatmul.f32.gmra.mxu0 %v733
    %v752 = vpop.f32.mrf.mxu0
    %v753 = vadd.f32 0.0, %v752
    %754 = vdwg.mxu0
    %v755 = vadd.f32 %v730, %v753
    %v756 = vxor.u32 %v755, 2147483648
    %v757 = vmul.f32 %v756, 1.442695
    %v758 = vpow.pop %v757
    %v759 = vadd.f32 %v758, 1.0
    %v760 = vrcp.pop %v759
    %v761 = vmul.f32 %v759, %v760
    %v762 = vsub.f32 1.0, %v761
    %v763 = vmul.f32 %v760, %v762
    %v764 = vadd.f32 %v760, %v763
    %vm765 = vweird.f32 %v759
    %vm766 = vweird.f32 %v760
    %vm767 = vmor %vm765, %vm766
    %v768 = vsel %vm767, %v760, %v764
    %v769 = vand.u32 2147483647, %v759
    %vm770 = vcmp.eq.f32.partialorder %v769, 8.507059e+37
    %v771 = vand.u32 %v759, 2147483648
    %v772 = vor.u32 1.1754944e-38, %v771
    %v773 = vsel %vm770, %v772, %v768
    %v774 = vmul.f32 1.0, %v773
    %v775 = vtanh.pop %v755
    %v777 = vperm.slane %v711, 0
    %778 = vrot.lane.b32.xlu0 %v777, 32
    %v779 = vpop.permute.xlu0 %778
    %v781 = vmul.f32 %v774, %v779
    %783 = vrot.lane.b32.xlu0 %v775, 64
    %v784 = vpop.permute.xlu0 %783
    %v786 = vmul.f32 %v774, %v784
    %788 = vrot.lane.b32.xlu0 %v786, 32
    %v789 = vpop.permute.xlu0 %788
    %v791 = vadd.f32 %v781, %v789
    %v792 = vtanh.pop %v791
    %794 = vrot.lane.b32.xlu0 %v792, 64
    %v795 = vpop.permute.xlu0 %794
    %v797 = vmul.f32 %v774, %v795
    %799 = vrot.lane.b32.xlu0 %v797, 32
    %v800 = vpop.permute.xlu0 %799
    %v801 = vsel %vm95, %v800, 0
    %803 = vmatpush.msra.mxu0 0.0
    %804 = vmatpush.msra.mxu0 0.0
    %805 = vmatpush.msra.mxu0 0.0
    %806 = vmatpush.msra.mxu0 0.0
    %807 = vmatpush.msra.mxu0 0.0
    %808 = vmatpush.msra.mxu0 0.0
    %809 = vmatpush.msra.mxu0 0.0
    %810 = vmatpush.msra.mxu0 0.0
    %811 = vmatpush.msra.mxu0 0.0
    %812 = vmatpush.msra.mxu0 0.0
    %813 = vmatpush.msra.mxu0 0.0
    %814 = vmatpush.msra.mxu0 0.0
    %815 = vmatpush.msra.mxu0 %v122
    %816 = vmatpush.msra.mxu0 %v121
    %817 = vmatpush.msra.mxu0 %v120
    %818 = vmatpush.msra.mxu0 %v119
    %819 = vmatmul.f32.gmra.mxu0 %v801
    %v820 = vpop.f32.mrf.mxu0
    %v821 = vadd.f32 %v123, %v820
    %822 = vdwg.mxu0
    %823 = vst [vmem:[#allocation5] sm:$0x1] %v821
    %824 = vmatpush.msra.mxu0 0.0
    %825 = vmatpush.msra.mxu0 0.0
    %826 = vmatpush.msra.mxu0 0.0
    %827 = vmatpush.msra.mxu0 0.0
    %828 = vmatpush.msra.mxu0 0.0
    %829 = vmatpush.msra.mxu0 0.0
    %830 = vmatpush.msra.mxu0 0.0
    %831 = vmatpush.msra.mxu0 0.0
    %832 = vmatpush.msra.mxu0 0.0
    %833 = vmatpush.msra.mxu0 0.0
    %834 = vmatpush.msra.mxu0 0.0
    %835 = vmatpush.msra.mxu0 0.0
    %836 = vmatpush.msra.mxu0 %v705
    %837 = vmatpush.msra.mxu0 %v704
    %838 = vmatpush.msra.mxu0 %v703
    %839 = vmatpush.msra.mxu0 %v702
    %840 = vmatmul.f32.gmra.mxu0 %v269
    %v841 = vpop.f32.mrf.mxu0
    %v842 = vadd.f32 %v707, %v841
    %843 = vdwg.mxu0
    %844 = vmatpush.msra.mxu0 0.0
    %845 = vmatpush.msra.mxu0 0.0
    %846 = vmatpush.msra.mxu0 0.0
    %847 = vmatpush.msra.mxu0 0.0
    %848 = vmatpush.msra.mxu0 0.0
    %849 = vmatpush.msra.mxu0 0.0
    %850 = vmatpush.msra.mxu0 0.0
    %851 = vmatpush.msra.mxu0 0.0
    %852 = vmatpush.msra.mxu0 0.0
    %853 = vmatpush.msra.mxu0 0.0
    %854 = vmatpush.msra.mxu0 0.0
    %855 = vmatpush.msra.mxu0 0.0
    %856 = vmatpush.msra.mxu0 %v700
    %857 = vmatpush.msra.mxu0 %v699
    %858 = vmatpush.msra.mxu0 %v698
    %859 = vmatpush.msra.mxu0 %v697
    %860 = vmatmul.f32.gmra.mxu0 %v801
    %v861 = vpop.f32.mrf.mxu0
    %v862 = vadd.f32 0.0, %v861
    %863 = vdwg.mxu0
    %v864 = vadd.f32 %v842, %v862
    %v865 = vxor.u32 %v864, 2147483648
    %v866 = vmul.f32 %v865, 1.442695
    %v867 = vpow.pop %v866
    %v868 = vadd.f32 %v867, 1.0
    %v869 = vrcp.pop %v868
    %v870 = vmul.f32 %v868, %v869
    %v871 = vsub.f32 1.0, %v870
    %v872 = vmul.f32 %v869, %v871
    %v873 = vadd.f32 %v869, %v872
    %vm874 = vweird.f32 %v868
    %vm875 = vweird.f32 %v869
    %vm876 = vmor %vm874, %vm875
    %v877 = vsel %vm876, %v869, %v873
    %v878 = vand.u32 2147483647, %v868
    %vm879 = vcmp.eq.f32.partialorder %v878, 8.507059e+37
    %v880 = vand.u32 %v868, 2147483648
    %v881 = vor.u32 1.1754944e-38, %v880
    %v882 = vsel %vm879, %v881, %v877
    %v883 = vmul.f32 1.0, %v882
    %v884 = vtanh.pop %v864
    %v885 = vmul.f32 %v883, %v791
    %887 = vrot.lane.b32.xlu0 %v884, 64
    %v888 = vpop.permute.xlu0 %887
    %v890 = vmul.f32 %v883, %v888
    %892 = vrot.lane.b32.xlu0 %v890, 32
    %v893 = vpop.permute.xlu0 %892
    %v895 = vadd.f32 %v885, %v893
    %v896 = vtanh.pop %v895
    %898 = vrot.lane.b32.xlu0 %v896, 64
    %v899 = vpop.permute.xlu0 %898
    %v901 = vmul.f32 %v883, %v899
    %903 = vrot.lane.b32.xlu0 %v901, 32
    %v904 = vpop.permute.xlu0 %903
    %v905 = vsel %vm95, %v904, 0
    %907 = vmatpush.msra.mxu0 0.0
    %908 = vmatpush.msra.mxu0 0.0
    %909 = vmatpush.msra.mxu0 0.0
    %910 = vmatpush.msra.mxu0 0.0
    %911 = vmatpush.msra.mxu0 0.0
    %912 = vmatpush.msra.mxu0 0.0
    %913 = vmatpush.msra.mxu0 0.0
    %914 = vmatpush.msra.mxu0 0.0
    %915 = vmatpush.msra.mxu0 0.0
    %916 = vmatpush.msra.mxu0 0.0
    %917 = vmatpush.msra.mxu0 0.0
    %918 = vmatpush.msra.mxu0 0.0
    %919 = vmatpush.msra.mxu0 %v122
    %920 = vmatpush.msra.mxu0 %v121
    %921 = vmatpush.msra.mxu0 %v120
    %922 = vmatpush.msra.mxu0 %v119
    %923 = vmatmul.f32.gmra.mxu0 %v905
    %v924 = vpop.f32.mrf.mxu0
    %v925 = vadd.f32 %v123, %v924
    %926 = vdwg.mxu0
    %927 = vst [vmem:[#allocation5 + $0x1] sm:$0x1] %v925
    %928 = vmatpush.msra.mxu0 0.0
    %929 = vmatpush.msra.mxu0 0.0
    %930 = vmatpush.msra.mxu0 0.0
    %931 = vmatpush.msra.mxu0 0.0
    %932 = vmatpush.msra.mxu0 0.0
    %933 = vmatpush.msra.mxu0 0.0
    %934 = vmatpush.msra.mxu0 0.0
    %935 = vmatpush.msra.mxu0 0.0
    %936 = vmatpush.msra.mxu0 0.0
    %937 = vmatpush.msra.mxu0 0.0
    %938 = vmatpush.msra.mxu0 0.0
    %939 = vmatpush.msra.mxu0 0.0
    %940 = vmatpush.msra.mxu0 %v705
    %941 = vmatpush.msra.mxu0 %v704
    %942 = vmatpush.msra.mxu0 %v703
    %943 = vmatpush.msra.mxu0 %v702
    %944 = vmatmul.f32.gmra.mxu0 %v339
    %v945 = vpop.f32.mrf.mxu0
    %v946 = vadd.f32 %v707, %v945
    %947 = vdwg.mxu0
    %948 = vmatpush.msra.mxu0 0.0
    %949 = vmatpush.msra.mxu0 0.0
    %950 = vmatpush.msra.mxu0 0.0
    %951 = vmatpush.msra.mxu0 0.0
    %952 = vmatpush.msra.mxu0 0.0
    %953 = vmatpush.msra.mxu0 0.0
    %954 = vmatpush.msra.mxu0 0.0
    %955 = vmatpush.msra.mxu0 0.0
    %956 = vmatpush.msra.mxu0 0.0
    %957 = vmatpush.msra.mxu0 0.0
    %958 = vmatpush.msra.mxu0 0.0
    %959 = vmatpush.msra.mxu0 0.0
    %960 = vmatpush.msra.mxu0 %v700
    %961 = vmatpush.msra.mxu0 %v699
    %962 = vmatpush.msra.mxu0 %v698
    %963 = vmatpush.msra.mxu0 %v697
    %964 = vmatmul.f32.gmra.mxu0 %v905
    %v965 = vpop.f32.mrf.mxu0
    %v966 = vadd.f32 0.0, %v965
    %967 = vdwg.mxu0
    %v968 = vadd.f32 %v946, %v966
    %v969 = vxor.u32 %v968, 2147483648
    %v970 = vmul.f32 %v969, 1.442695
    %v971 = vpow.pop %v970
    %v972 = vadd.f32 %v971, 1.0
    %v973 = vrcp.pop %v972
    %v974 = vmul.f32 %v972, %v973
    %v975 = vsub.f32 1.0, %v974
    %v976 = vmul.f32 %v973, %v975
    %v977 = vadd.f32 %v973, %v976
    %vm978 = vweird.f32 %v972
    %vm979 = vweird.f32 %v973
    %vm980 = vmor %vm978, %vm979
    %v981 = vsel %vm980, %v973, %v977
    %v982 = vand.u32 2147483647, %v972
    %vm983 = vcmp.eq.f32.partialorder %v982, 8.507059e+37
    %v984 = vand.u32 %v972, 2147483648
    %v985 = vor.u32 1.1754944e-38, %v984
    %v986 = vsel %vm983, %v985, %v981
    %v987 = vmul.f32 1.0, %v986
    %v988 = vtanh.pop %v968
    %v989 = vmul.f32 %v987, %v895
    %991 = vrot.lane.b32.xlu0 %v988, 64
    %v992 = vpop.permute.xlu0 %991
    %v994 = vmul.f32 %v987, %v992
    %996 = vrot.lane.b32.xlu0 %v994, 32
    %v997 = vpop.permute.xlu0 %996
    %v999 = vadd.f32 %v989, %v997
    %v1000 = vtanh.pop %v999
    %1002 = vrot.lane.b32.xlu0 %v1000, 64
    %v1003 = vpop.permute.xlu0 %1002
    %v1005 = vmul.f32 %v987, %v1003
    %1007 = vrot.lane.b32.xlu0 %v1005, 32
    %v1008 = vpop.permute.xlu0 %1007
    %v1009 = vsel %vm95, %v1008, 0
    %1011 = vmatpush.msra.mxu0 0.0
    %1012 = vmatpush.msra.mxu0 0.0
    %1013 = vmatpush.msra.mxu0 0.0
    %1014 = vmatpush.msra.mxu0 0.0
    %1015 = vmatpush.msra.mxu0 0.0
    %1016 = vmatpush.msra.mxu0 0.0
    %1017 = vmatpush.msra.mxu0 0.0
    %1018 = vmatpush.msra.mxu0 0.0
    %1019 = vmatpush.msra.mxu0 0.0
    %1020 = vmatpush.msra.mxu0 0.0
    %1021 = vmatpush.msra.mxu0 0.0
    %1022 = vmatpush.msra.mxu0 0.0
    %1023 = vmatpush.msra.mxu0 %v122
    %1024 = vmatpush.msra.mxu0 %v121
    %1025 = vmatpush.msra.mxu0 %v120
    %1026 = vmatpush.msra.mxu0 %v119
    %1027 = vmatmul.f32.gmra.mxu0 %v1009
    %v1028 = vpop.f32.mrf.mxu0
    %v1029 = vadd.f32 %v123, %v1028
    %1030 = vdwg.mxu0
    %1031 = vst [vmem:[#allocation5 + $0x2] sm:$0x1] %v1029
    %1032 = vmatpush.msra.mxu0 0.0
    %1033 = vmatpush.msra.mxu0 0.0
    %1034 = vmatpush.msra.mxu0 0.0
    %1035 = vmatpush.msra.mxu0 0.0
    %1036 = vmatpush.msra.mxu0 0.0
    %1037 = vmatpush.msra.mxu0 0.0
    %1038 = vmatpush.msra.mxu0 0.0
    %1039 = vmatpush.msra.mxu0 0.0
    %1040 = vmatpush.msra.mxu0 0.0
    %1041 = vmatpush.msra.mxu0 0.0
    %1042 = vmatpush.msra.mxu0 0.0
    %1043 = vmatpush.msra.mxu0 0.0
    %1044 = vmatpush.msra.mxu0 %v705
    %1045 = vmatpush.msra.mxu0 %v704
    %1046 = vmatpush.msra.mxu0 %v703
    %1047 = vmatpush.msra.mxu0 %v702
    %1048 = vmatmul.f32.gmra.mxu0 %v409
    %v1049 = vpop.f32.mrf.mxu0
    %v1050 = vadd.f32 %v707, %v1049
    %1051 = vdwg.mxu0
    %1052 = vmatpush.msra.mxu0 0.0
    %1053 = vmatpush.msra.mxu0 0.0
    %1054 = vmatpush.msra.mxu0 0.0
    %1055 = vmatpush.msra.mxu0 0.0
    %1056 = vmatpush.msra.mxu0 0.0
    %1057 = vmatpush.msra.mxu0 0.0
    %1058 = vmatpush.msra.mxu0 0.0
    %1059 = vmatpush.msra.mxu0 0.0
    %1060 = vmatpush.msra.mxu0 0.0
    %1061 = vmatpush.msra.mxu0 0.0
    %1062 = vmatpush.msra.mxu0 0.0
    %1063 = vmatpush.msra.mxu0 0.0
    %1064 = vmatpush.msra.mxu0 %v700
    %1065 = vmatpush.msra.mxu0 %v699
    %1066 = vmatpush.msra.mxu0 %v698
    %1067 = vmatpush.msra.mxu0 %v697
    %1068 = vmatmul.f32.gmra.mxu0 %v1009
    %v1069 = vpop.f32.mrf.mxu0
    %v1070 = vadd.f32 0.0, %v1069
    %1071 = vdwg.mxu0
    %v1072 = vadd.f32 %v1050, %v1070
    %v1073 = vxor.u32 %v1072, 2147483648
    %v1074 = vmul.f32 %v1073, 1.442695
    %v1075 = vpow.pop %v1074
    %v1076 = vadd.f32 %v1075, 1.0
    %v1077 = vrcp.pop %v1076
    %v1078 = vmul.f32 %v1076, %v1077
    %v1079 = vsub.f32 1.0, %v1078
    %v1080 = vmul.f32 %v1077, %v1079
    %v1081 = vadd.f32 %v1077, %v1080
    %vm1082 = vweird.f32 %v1076
    %vm1083 = vweird.f32 %v1077
    %vm1084 = vmor %vm1082, %vm1083
    %v1085 = vsel %vm1084, %v1077, %v1081
    %v1086 = vand.u32 2147483647, %v1076
    %vm1087 = vcmp.eq.f32.partialorder %v1086, 8.507059e+37
    %v1088 = vand.u32 %v1076, 2147483648
    %v1089 = vor.u32 1.1754944e-38, %v1088
    %v1090 = vsel %vm1087, %v1089, %v1085
    %v1091 = vmul.f32 1.0, %v1090
    %v1092 = vtanh.pop %v1072
    %v1093 = vmul.f32 %v1091, %v999
    %1095 = vrot.lane.b32.xlu0 %v1092, 64
    %v1096 = vpop.permute.xlu0 %1095
    %v1098 = vmul.f32 %v1091, %v1096
    %1100 = vrot.lane.b32.xlu0 %v1098, 32
    %v1101 = vpop.permute.xlu0 %1100
    %v1103 = vadd.f32 %v1093, %v1101
    %v1104 = vtanh.pop %v1103
    %1106 = vrot.lane.b32.xlu0 %v1104, 64
    %v1107 = vpop.permute.xlu0 %1106
    %v1109 = vmul.f32 %v1091, %v1107
    %1111 = vrot.lane.b32.xlu0 %v1109, 32
    %v1112 = vpop.permute.xlu0 %1111
    %v1113 = vsel %vm95, %v1112, 0
    %1115 = vmatpush.msra.mxu0 0.0
    %1116 = vmatpush.msra.mxu0 0.0
    %1117 = vmatpush.msra.mxu0 0.0
    %1118 = vmatpush.msra.mxu0 0.0
    %1119 = vmatpush.msra.mxu0 0.0
    %1120 = vmatpush.msra.mxu0 0.0
    %1121 = vmatpush.msra.mxu0 0.0
    %1122 = vmatpush.msra.mxu0 0.0
    %1123 = vmatpush.msra.mxu0 0.0
    %1124 = vmatpush.msra.mxu0 0.0
    %1125 = vmatpush.msra.mxu0 0.0
    %1126 = vmatpush.msra.mxu0 0.0
    %1127 = vmatpush.msra.mxu0 %v122
    %1128 = vmatpush.msra.mxu0 %v121
    %1129 = vmatpush.msra.mxu0 %v120
    %1130 = vmatpush.msra.mxu0 %v119
    %1131 = vmatmul.f32.gmra.mxu0 %v1113
    %v1132 = vpop.f32.mrf.mxu0
    %v1133 = vadd.f32 %v123, %v1132
    %1134 = vdwg.mxu0
    %1135 = vst [vmem:[#allocation5 + $0x3] sm:$0x1] %v1133
    %1136 = vmatpush.msra.mxu0 0.0
    %1137 = vmatpush.msra.mxu0 0.0
    %1138 = vmatpush.msra.mxu0 0.0
    %1139 = vmatpush.msra.mxu0 0.0
    %1140 = vmatpush.msra.mxu0 0.0
    %1141 = vmatpush.msra.mxu0 0.0
    %1142 = vmatpush.msra.mxu0 0.0
    %1143 = vmatpush.msra.mxu0 0.0
    %1144 = vmatpush.msra.mxu0 0.0
    %1145 = vmatpush.msra.mxu0 0.0
    %1146 = vmatpush.msra.mxu0 0.0
    %1147 = vmatpush.msra.mxu0 0.0
    %1148 = vmatpush.msra.mxu0 %v705
    %1149 = vmatpush.msra.mxu0 %v704
    %1150 = vmatpush.msra.mxu0 %v703
    %1151 = vmatpush.msra.mxu0 %v702
    %1152 = vmatmul.f32.gmra.mxu0 %v479
    %v1153 = vpop.f32.mrf.mxu0
    %v1154 = vadd.f32 %v707, %v1153
    %1155 = vdwg.mxu0
    %1156 = vmatpush.msra.mxu0 0.0
    %1157 = vmatpush.msra.mxu0 0.0
    %1158 = vmatpush.msra.mxu0 0.0
    %1159 = vmatpush.msra.mxu0 0.0
    %1160 = vmatpush.msra.mxu0 0.0
    %1161 = vmatpush.msra.mxu0 0.0
    %1162 = vmatpush.msra.mxu0 0.0
    %1163 = vmatpush.msra.mxu0 0.0
    %1164 = vmatpush.msra.mxu0 0.0
    %1165 = vmatpush.msra.mxu0 0.0
    %1166 = vmatpush.msra.mxu0 0.0
    %1167 = vmatpush.msra.mxu0 0.0
    %1168 = vmatpush.msra.mxu0 %v700
    %1169 = vmatpush.msra.mxu0 %v699
    %1170 = vmatpush.msra.mxu0 %v698
    %1171 = vmatpush.msra.mxu0 %v697
    %1172 = vmatmul.f32.gmra.mxu0 %v1113
    %v1173 = vpop.f32.mrf.mxu0
    %v1174 = vadd.f32 0.0, %v1173
    %1175 = vdwg.mxu0
    %v1176 = vadd.f32 %v1154, %v1174
    %v1177 = vxor.u32 %v1176, 2147483648
    %v1178 = vmul.f32 %v1177, 1.442695
    %v1179 = vpow.pop %v1178
    %v1180 = vadd.f32 %v1179, 1.0
    %v1181 = vrcp.pop %v1180
    %v1182 = vmul.f32 %v1180, %v1181
    %v1183 = vsub.f32 1.0, %v1182
    %v1184 = vmul.f32 %v1181, %v1183
    %v1185 = vadd.f32 %v1181, %v1184
    %vm1186 = vweird.f32 %v1180
    %vm1187 = vweird.f32 %v1181
    %vm1188 = vmor %vm1186, %vm1187
    %v1189 = vsel %vm1188, %v1181, %v1185
    %v1190 = vand.u32 2147483647, %v1180
    %vm1191 = vcmp.eq.f32.partialorder %v1190, 8.507059e+37
    %v1192 = vand.u32 %v1180, 2147483648
    %v1193 = vor.u32 1.1754944e-38, %v1192
    %v1194 = vsel %vm1191, %v1193, %v1189
    %v1195 = vmul.f32 1.0, %v1194
    %v1196 = vtanh.pop %v1176
    %v1197 = vmul.f32 %v1195, %v1103
    %1199 = vrot.lane.b32.xlu0 %v1196, 64
    %v1200 = vpop.permute.xlu0 %1199
    %v1202 = vmul.f32 %v1195, %v1200
    %1204 = vrot.lane.b32.xlu0 %v1202, 32
    %v1205 = vpop.permute.xlu0 %1204
    %v1207 = vadd.f32 %v1197, %v1205
    %v1208 = vtanh.pop %v1207
    %1210 = vrot.lane.b32.xlu0 %v1208, 64
    %v1211 = vpop.permute.xlu0 %1210
    %v1213 = vmul.f32 %v1195, %v1211
    %1215 = vrot.lane.b32.xlu0 %v1213, 32
    %v1216 = vpop.permute.xlu0 %1215
    %v1217 = vsel %vm95, %v1216, 0
    %1219 = vmatpush.msra.mxu0 0.0
    %1220 = vmatpush.msra.mxu0 0.0
    %1221 = vmatpush.msra.mxu0 0.0
    %1222 = vmatpush.msra.mxu0 0.0
    %1223 = vmatpush.msra.mxu0 0.0
    %1224 = vmatpush.msra.mxu0 0.0
    %1225 = vmatpush.msra.mxu0 0.0
    %1226 = vmatpush.msra.mxu0 0.0
    %1227 = vmatpush.msra.mxu0 0.0
    %1228 = vmatpush.msra.mxu0 0.0
    %1229 = vmatpush.msra.mxu0 0.0
    %1230 = vmatpush.msra.mxu0 0.0
    %1231 = vmatpush.msra.mxu0 %v122
    %1232 = vmatpush.msra.mxu0 %v121
    %1233 = vmatpush.msra.mxu0 %v120
    %1234 = vmatpush.msra.mxu0 %v119
    %1235 = vmatmul.f32.gmra.mxu0 %v1217
    %v1236 = vpop.f32.mrf.mxu0
    %v1237 = vadd.f32 %v123, %v1236
    %1238 = vdwg.mxu0
    %1239 = vst [vmem:[#allocation5 + $0x4] sm:$0x1] %v1237
    %1240 = vmatpush.msra.mxu0 0.0
    %1241 = vmatpush.msra.mxu0 0.0
    %1242 = vmatpush.msra.mxu0 0.0
    %1243 = vmatpush.msra.mxu0 0.0
    %1244 = vmatpush.msra.mxu0 0.0
    %1245 = vmatpush.msra.mxu0 0.0
    %1246 = vmatpush.msra.mxu0 0.0
    %1247 = vmatpush.msra.mxu0 0.0
    %1248 = vmatpush.msra.mxu0 0.0
    %1249 = vmatpush.msra.mxu0 0.0
    %1250 = vmatpush.msra.mxu0 0.0
    %1251 = vmatpush.msra.mxu0 0.0
    %1252 = vmatpush.msra.mxu0 %v705
    %1253 = vmatpush.msra.mxu0 %v704
    %1254 = vmatpush.msra.mxu0 %v703
    %1255 = vmatpush.msra.mxu0 %v702
    %1256 = vmatmul.f32.gmra.mxu0 %v549
    %v1257 = vpop.f32.mrf.mxu0
    %v1258 = vadd.f32 %v707, %v1257
    %1259 = vdwg.mxu0
    %1260 = vmatpush.msra.mxu0 0.0
    %1261 = vmatpush.msra.mxu0 0.0
    %1262 = vmatpush.msra.mxu0 0.0
    %1263 = vmatpush.msra.mxu0 0.0
    %1264 = vmatpush.msra.mxu0 0.0
    %1265 = vmatpush.msra.mxu0 0.0
    %1266 = vmatpush.msra.mxu0 0.0
    %1267 = vmatpush.msra.mxu0 0.0
    %1268 = vmatpush.msra.mxu0 0.0
    %1269 = vmatpush.msra.mxu0 0.0
    %1270 = vmatpush.msra.mxu0 0.0
    %1271 = vmatpush.msra.mxu0 0.0
    %1272 = vmatpush.msra.mxu0 %v700
    %1273 = vmatpush.msra.mxu0 %v699
    %1274 = vmatpush.msra.mxu0 %v698
    %1275 = vmatpush.msra.mxu0 %v697
    %1276 = vmatmul.f32.gmra.mxu0 %v1217
    %v1277 = vpop.f32.mrf.mxu0
    %v1278 = vadd.f32 0.0, %v1277
    %1279 = vdwg.mxu0
    %v1280 = vadd.f32 %v1258, %v1278
    %v1281 = vxor.u32 %v1280, 2147483648
    %v1282 = vmul.f32 %v1281, 1.442695
    %v1283 = vpow.pop %v1282
    %v1284 = vadd.f32 %v1283, 1.0
    %v1285 = vrcp.pop %v1284
    %v1286 = vmul.f32 %v1284, %v1285
    %v1287 = vsub.f32 1.0, %v1286
    %v1288 = vmul.f32 %v1285, %v1287
    %v1289 = vadd.f32 %v1285, %v1288
    %vm1290 = vweird.f32 %v1284
    %vm1291 = vweird.f32 %v1285
    %vm1292 = vmor %vm1290, %vm1291
    %v1293 = vsel %vm1292, %v1285, %v1289
    %v1294 = vand.u32 2147483647, %v1284
    %vm1295 = vcmp.eq.f32.partialorder %v1294, 8.507059e+37
    %v1296 = vand.u32 %v1284, 2147483648
    %v1297 = vor.u32 1.1754944e-38, %v1296
    %v1298 = vsel %vm1295, %v1297, %v1293
    %v1299 = vmul.f32 1.0, %v1298
    %v1300 = vtanh.pop %v1280
    %v1301 = vmul.f32 %v1299, %v1207
    %1303 = vrot.lane.b32.xlu0 %v1300, 64
    %v1304 = vpop.permute.xlu0 %1303
    %v1306 = vmul.f32 %v1299, %v1304
    %1308 = vrot.lane.b32.xlu0 %v1306, 32
    %v1309 = vpop.permute.xlu0 %1308
    %v1311 = vadd.f32 %v1301, %v1309
    %v1312 = vtanh.pop %v1311
    %1314 = vrot.lane.b32.xlu0 %v1312, 64
    %v1315 = vpop.permute.xlu0 %1314
    %v1317 = vmul.f32 %v1299, %v1315
    %1319 = vrot.lane.b32.xlu0 %v1317, 32
    %v1320 = vpop.permute.xlu0 %1319
    %v1321 = vsel %vm95, %v1320, 0
    %1323 = vmatpush.msra.mxu0 0.0
    %1324 = vmatpush.msra.mxu0 0.0
    %1325 = vmatpush.msra.mxu0 0.0
    %1326 = vmatpush.msra.mxu0 0.0
    %1327 = vmatpush.msra.mxu0 0.0
    %1328 = vmatpush.msra.mxu0 0.0
    %1329 = vmatpush.msra.mxu0 0.0
    %1330 = vmatpush.msra.mxu0 0.0
    %1331 = vmatpush.msra.mxu0 0.0
    %1332 = vmatpush.msra.mxu0 0.0
    %1333 = vmatpush.msra.mxu0 0.0
    %1334 = vmatpush.msra.mxu0 0.0
    %1335 = vmatpush.msra.mxu0 %v122
    %1336 = vmatpush.msra.mxu0 %v121
    %1337 = vmatpush.msra.mxu0 %v120
    %1338 = vmatpush.msra.mxu0 %v119
    %1339 = vmatmul.f32.gmra.mxu0 %v1321
    %v1340 = vpop.f32.mrf.mxu0
    %v1341 = vadd.f32 %v123, %v1340
    %1342 = vdwg.mxu0
    %1343 = vst [vmem:[#allocation5 + $0x5] sm:$0x1] %v1341
    %1344 = vmatpush.msra.mxu0 0.0
    %1345 = vmatpush.msra.mxu0 0.0
    %1346 = vmatpush.msra.mxu0 0.0
    %1347 = vmatpush.msra.mxu0 0.0
    %1348 = vmatpush.msra.mxu0 0.0
    %1349 = vmatpush.msra.mxu0 0.0
    %1350 = vmatpush.msra.mxu0 0.0
    %1351 = vmatpush.msra.mxu0 0.0
    %1352 = vmatpush.msra.mxu0 0.0
    %1353 = vmatpush.msra.mxu0 0.0
    %1354 = vmatpush.msra.mxu0 0.0
    %1355 = vmatpush.msra.mxu0 0.0
    %1356 = vmatpush.msra.mxu0 %v705
    %1357 = vmatpush.msra.mxu0 %v704
    %1358 = vmatpush.msra.mxu0 %v703
    %1359 = vmatpush.msra.mxu0 %v702
    %1360 = vmatmul.f32.gmra.mxu0 %v619
    %v1361 = vpop.f32.mrf.mxu0
    %v1362 = vadd.f32 %v707, %v1361
    %1363 = vdwg.mxu0
    %1364 = vmatpush.msra.mxu0 0.0
    %1365 = vmatpush.msra.mxu0 0.0
    %1366 = vmatpush.msra.mxu0 0.0
    %1367 = vmatpush.msra.mxu0 0.0
    %1368 = vmatpush.msra.mxu0 0.0
    %1369 = vmatpush.msra.mxu0 0.0
    %1370 = vmatpush.msra.mxu0 0.0
    %1371 = vmatpush.msra.mxu0 0.0
    %1372 = vmatpush.msra.mxu0 0.0
    %1373 = vmatpush.msra.mxu0 0.0
    %1374 = vmatpush.msra.mxu0 0.0
    %1375 = vmatpush.msra.mxu0 0.0
    %1376 = vmatpush.msra.mxu0 %v700
    %1377 = vmatpush.msra.mxu0 %v699
    %1378 = vmatpush.msra.mxu0 %v698
    %1379 = vmatpush.msra.mxu0 %v697
    %1380 = vmatmul.f32.gmra.mxu0 %v1321
    %v1381 = vpop.f32.mrf.mxu0
    %v1382 = vadd.f32 0.0, %v1381
    %1383 = vdwg.mxu0
    %v1384 = vadd.f32 %v1362, %v1382
    %v1385 = vxor.u32 %v1384, 2147483648
    %v1386 = vmul.f32 %v1385, 1.442695
    %v1387 = vpow.pop %v1386
    %v1388 = vadd.f32 %v1387, 1.0
    %v1389 = vrcp.pop %v1388
    %v1390 = vmul.f32 %v1388, %v1389
    %v1391 = vsub.f32 1.0, %v1390
    %v1392 = vmul.f32 %v1389, %v1391
    %v1393 = vadd.f32 %v1389, %v1392
    %vm1394 = vweird.f32 %v1388
    %vm1395 = vweird.f32 %v1389
    %vm1396 = vmor %vm1394, %vm1395
    %v1397 = vsel %vm1396, %v1389, %v1393
    %v1398 = vand.u32 2147483647, %v1388
    %vm1399 = vcmp.eq.f32.partialorder %v1398, 8.507059e+37
    %v1400 = vand.u32 %v1388, 2147483648
    %v1401 = vor.u32 1.1754944e-38, %v1400
    %v1402 = vsel %vm1399, %v1401, %v1397
    %v1403 = vmul.f32 1.0, %v1402
    %v1404 = vtanh.pop %v1384
    %v1405 = vmul.f32 %v1403, %v1311
    %1407 = vrot.lane.b32.xlu0 %v1404, 64
    %v1408 = vpop.permute.xlu0 %1407
    %v1410 = vmul.f32 %v1403, %v1408
    %1412 = vrot.lane.b32.xlu0 %v1410, 32
    %v1413 = vpop.permute.xlu0 %1412
    %v1415 = vadd.f32 %v1405, %v1413
    %v1416 = vtanh.pop %v1415
    %1418 = vrot.lane.b32.xlu0 %v1416, 64
    %v1419 = vpop.permute.xlu0 %1418
    %v1421 = vmul.f32 %v1403, %v1419
    %1423 = vrot.lane.b32.xlu0 %v1421, 32
    %v1424 = vpop.permute.xlu0 %1423
    %v1425 = vsel %vm95, %v1424, 0
    %1427 = vmatpush.msra.mxu0 0.0
    %1428 = vmatpush.msra.mxu0 0.0
    %1429 = vmatpush.msra.mxu0 0.0
    %1430 = vmatpush.msra.mxu0 0.0
    %1431 = vmatpush.msra.mxu0 0.0
    %1432 = vmatpush.msra.mxu0 0.0
    %1433 = vmatpush.msra.mxu0 0.0
    %1434 = vmatpush.msra.mxu0 0.0
    %1435 = vmatpush.msra.mxu0 0.0
    %1436 = vmatpush.msra.mxu0 0.0
    %1437 = vmatpush.msra.mxu0 0.0
    %1438 = vmatpush.msra.mxu0 0.0
    %1439 = vmatpush.msra.mxu0 %v122
    %1440 = vmatpush.msra.mxu0 %v121
    %1441 = vmatpush.msra.mxu0 %v120
    %1442 = vmatpush.msra.mxu0 %v119
    %1443 = vmatmul.f32.gmra.mxu0 %v1425
    %v1444 = vpop.f32.mrf.mxu0
    %v1445 = vadd.f32 %v123, %v1444
    %1446 = vdwg.mxu0
    %1447 = vst [vmem:[#allocation5 + $0x6] sm:$0x1] %v1445
    %v1448 = vrot.slane %v684, 7
    %1449 = vrot.lane.b32.xlu0 %v1448, 32
    %v1450 = vpop.permute.xlu0 %1449
    %v1451 = vsel %vm95, %v1450, 0
    %1453 = vmatpush.msra.mxu0 0.0
    %1454 = vmatpush.msra.mxu0 0.0
    %1455 = vmatpush.msra.mxu0 0.0
    %1456 = vmatpush.msra.mxu0 0.0
    %1457 = vmatpush.msra.mxu0 0.0
    %1458 = vmatpush.msra.mxu0 0.0
    %1459 = vmatpush.msra.mxu0 0.0
    %1460 = vmatpush.msra.mxu0 0.0
    %1461 = vmatpush.msra.mxu0 0.0
    %1462 = vmatpush.msra.mxu0 0.0
    %1463 = vmatpush.msra.mxu0 0.0
    %1464 = vmatpush.msra.mxu0 0.0
    %1465 = vmatpush.msra.mxu0 %v705
    %1466 = vmatpush.msra.mxu0 %v704
    %1467 = vmatpush.msra.mxu0 %v703
    %1468 = vmatpush.msra.mxu0 %v702
    %1469 = vmatmul.f32.gmra.mxu0 %v1451
    %v1470 = vpop.f32.mrf.mxu0
    %v1471 = vadd.f32 %v707, %v1470
    %1472 = vdwg.mxu0
    %1473 = vmatpush.msra.mxu0 0.0
    %1474 = vmatpush.msra.mxu0 0.0
    %1475 = vmatpush.msra.mxu0 0.0
    %1476 = vmatpush.msra.mxu0 0.0
    %1477 = vmatpush.msra.mxu0 0.0
    %1478 = vmatpush.msra.mxu0 0.0
    %1479 = vmatpush.msra.mxu0 0.0
    %1480 = vmatpush.msra.mxu0 0.0
    %1481 = vmatpush.msra.mxu0 0.0
    %1482 = vmatpush.msra.mxu0 0.0
    %1483 = vmatpush.msra.mxu0 0.0
    %1484 = vmatpush.msra.mxu0 0.0
    %1485 = vmatpush.msra.mxu0 %v700
    %1486 = vmatpush.msra.mxu0 %v699
    %1487 = vmatpush.msra.mxu0 %v698
    %1488 = vmatpush.msra.mxu0 %v697
    %1489 = vmatmul.f32.gmra.mxu0 %v1425
    %v1490 = vpop.f32.mrf.mxu0
    %v1491 = vadd.f32 0.0, %v1490
    %1492 = vdwg.mxu0
    %v1493 = vadd.f32 %v1471, %v1491
    %v1494 = vxor.u32 %v1493, 2147483648
    %v1495 = vmul.f32 %v1494, 1.442695
    %v1496 = vpow.pop %v1495
    %v1497 = vadd.f32 %v1496, 1.0
    %v1498 = vrcp.pop %v1497
    %v1499 = vmul.f32 %v1497, %v1498
    %v1500 = vsub.f32 1.0, %v1499
    %v1501 = vmul.f32 %v1498, %v1500
    %v1502 = vadd.f32 %v1498, %v1501
    %vm1503 = vweird.f32 %v1497
    %vm1504 = vweird.f32 %v1498
    %vm1505 = vmor %vm1503, %vm1504
    %v1506 = vsel %vm1505, %v1498, %v1502
    %v1507 = vand.u32 2147483647, %v1497
    %vm1508 = vcmp.eq.f32.partialorder %v1507, 8.507059e+37
    %v1509 = vand.u32 %v1497, 2147483648
    %v1510 = vor.u32 1.1754944e-38, %v1509
    %v1511 = vsel %vm1508, %v1510, %v1506
    %v1512 = vmul.f32 1.0, %v1511
    %v1513 = vtanh.pop %v1493
    %v1514 = vmul.f32 %v1512, %v1415
    %1516 = vrot.lane.b32.xlu0 %v1513, 64
    %v1517 = vpop.permute.xlu0 %1516
    %v1519 = vmul.f32 %v1512, %v1517
    %1521 = vrot.lane.b32.xlu0 %v1519, 32
    %v1522 = vpop.permute.xlu0 %1521
    %v1524 = vadd.f32 %v1514, %v1522
    %v1525 = vtanh.pop %v1524
    %1527 = vrot.lane.b32.xlu0 %v1525, 64
    %v1528 = vpop.permute.xlu0 %1527
    %v1530 = vmul.f32 %v1512, %v1528
    %1532 = vrot.lane.b32.xlu0 %v1530, 32
    %v1533 = vpop.permute.xlu0 %1532
    %v1534 = vsel %vm95, %v1533, 0
    %1536 = vmatpush.msra.mxu0 0.0
    %1537 = vmatpush.msra.mxu0 0.0
    %1538 = vmatpush.msra.mxu0 0.0
    %1539 = vmatpush.msra.mxu0 0.0
    %1540 = vmatpush.msra.mxu0 0.0
    %1541 = vmatpush.msra.mxu0 0.0
    %1542 = vmatpush.msra.mxu0 0.0
    %1543 = vmatpush.msra.mxu0 0.0
    %1544 = vmatpush.msra.mxu0 0.0
    %1545 = vmatpush.msra.mxu0 0.0
    %1546 = vmatpush.msra.mxu0 0.0
    %1547 = vmatpush.msra.mxu0 0.0
    %1548 = vmatpush.msra.mxu0 %v122
    %1549 = vmatpush.msra.mxu0 %v121
    %1550 = vmatpush.msra.mxu0 %v120
    %1551 = vmatpush.msra.mxu0 %v119
    %1552 = vmatmul.f32.gmra.mxu0 %v1534
    %v1553 = vpop.f32.mrf.mxu0
    %v1554 = vadd.f32 %v123, %v1553
    %1555 = vdwg.mxu0
    %1556 = vst [vmem:[#allocation5 + $0x7] sm:$0x1] %v1554
    %s1558 = scalar_lea.vmem [#allocation6], 1
    %vm1559 = vcmask 253952
    %1560 = vst.msk [vmem:[%s1558] sm:$0x1] %vm1559, %v1533
    %1562 = vrot.lane.b32.xlu0 %v1524, 96
    %v1563 = vpop.permute.xlu0 %1562
    %s1565 = scalar_lea.vmem [#allocation8], 1
    %1566 = vst.msk [vmem:[%s1565] sm:$0x1] %vm1559, %v1563
    // Predicated region
    $region46: #{lstm_model_forward.1} parent=1 // pred_check
      _
    $region47: #{lstm_model_forward.1} parent=1 // pred_check_branch
      %1568 = sbr.rel (0) target = $region49
    $region48: #{lstm_model_forward.1} parent=1 // pred_region
      %1570 = vsyncadd [#allocation4], 0
      %s1572 = sshll.u32 [#allocation5], 4
      %s1573 = int_to_ptr.vmem [resolvable:$true] %s1572
      %s1574 = sshll.u32 %s10, 4
      %s1575 = int_to_ptr.hbm [resolvable:$true] %s1574
      %1577 = dma.vmem_to_hbm [thread:$0]  %s1573, 128, %s1575, [#allocation4]
    $region49: #{lstm_model_forward.1} parent=1 // pred_fallthru
      _
    // Predicated region
    $region50: #{lstm_model_forward.1} parent=1 // pred_check
      _
    $region51: #{lstm_model_forward.1} parent=1 // pred_check_branch
      %1579 = sbr.rel (0) target = $region53
    $region52: #{lstm_model_forward.1} parent=1 // pred_region
      %1581 = vsyncadd [#allocation7], 0
      %s1582 = sshll.u32 [#allocation6], 4
      %s1583 = int_to_ptr.vmem [resolvable:$true] %s1582
      %s1584 = sshll.u32 %s11, 4
      %s1585 = int_to_ptr.hbm [resolvable:$true] %s1584
      %1590 = dma.vmem_to_hbm [thread:$0]  %s1583, 32, %s1585, [#allocation7], 16, 16, 1
    $region53: #{lstm_model_forward.1} parent=1 // pred_fallthru
      _
    // Predicated region
    $region54: #{lstm_model_forward.1} parent=1 // pred_check
      _
    $region55: #{lstm_model_forward.1} parent=1 // pred_check_branch
      %1592 = sbr.rel (0) target = $region57
    $region56: #{lstm_model_forward.1} parent=1 // pred_region
      %1594 = vsyncadd [#allocation7], 0
      %s1595 = sshll.u32 [#allocation8], 4
      %s1596 = int_to_ptr.vmem [resolvable:$true] %s1595
      %s1597 = sshll.u32 %s12, 4
      %s1598 = int_to_ptr.hbm [resolvable:$true] %s1597
      %1603 = dma.vmem_to_hbm [thread:$0]  %s1596, 32, %s1598, [#allocation7], 16, 16, 1
    $region57: #{lstm_model_forward.1} parent=1 // pred_fallthru
      _
    // Predicated region
    $region58: #{lstm_model_forward.1} parent=1 // pred_check
      _
    $region59: #{lstm_model_forward.1} parent=1 // pred_check_branch
      %1605 = sbr.rel (0) target = $region61
    $region60: #{lstm_model_forward.1} parent=1 // pred_region
      %1607 = dma.done [#allocation4], 128
    $region61: #{lstm_model_forward.1} parent=1 // pred_fallthru
      _
    // Predicated region
    $region62: #{lstm_model_forward.1} parent=1 // pred_check
      _
    $region63: #{lstm_model_forward.1} parent=1 // pred_check_branch
      %1609 = sbr.rel (0) target = $region65
    $region64: #{lstm_model_forward.1} parent=1 // pred_region
      %1611 = dma.done [#allocation7], 32
    $region65: #{lstm_model_forward.1} parent=1 // pred_fallthru
      _
    // Predicated region
    $region66: #{lstm_model_forward.1} parent=1 // pred_check
      _
    $region67: #{lstm_model_forward.1} parent=1 // pred_check_branch
      %1613 = sbr.rel (0) target = $region69
    $region68: #{lstm_model_forward.1} parent=1 // pred_region
      %1615 = dma.done [#allocation7], 32
    $region69: #{lstm_model_forward.1} parent=1 // pred_fallthru
      _
    %1616 = vsyncpa [#allocation3], 1
    %1617 = vsyncpa [#allocation4], 1
    %1618 = vsyncpa [#allocation7], 1

</llo_original>
